<compile_context>
chip_gen: v5e
topology: v5e:2x2
jax: 0.10.0
libtpu: 0.0.40
codegen_flags: <defaults>
</compile_context>

<pallas_src>
import math
import functools

import jax
import jax.numpy as jnp
from jax.experimental import pallas as pl
from jax.experimental.pallas import tpu as pltpu


def _round_up(x, m):
    return ((x + m - 1) // m) * m


def _relayout_gate_cols(m, h, h_pad):
    """Split last dim [i|f|g|o] (width h each), zero-pad each gate block to width
    h_pad, and reorder to [i|f|o|g] so the three sigmoid gates are one contiguous
    slice and tanh gets one slice."""
    pad = [(0, 0)] * (m.ndim - 1) + [(0, h_pad - h)]
    blocks = [m[..., k * h:(k + 1) * h] for k in range(4)]   # i, f, g, o
    order = (0, 1, 3, 2)                                     # -> i, f, o, g
    return jnp.concatenate([jnp.pad(blocks[k], pad) for k in order], axis=-1)


def _vmem_capacity_bytes():
    try:
        return int(pltpu.get_tpu_info().vmem_capacity_bytes)
    except Exception:
        return 64 * 1024 * 1024   # conservative: v7x per-TC VMEM


def _pick_time_block(seq_len, b_block, h_pad, u_bytes_per_elt, vmem_cap):
    """Pick the largest time block whose double-buffered footprint fits VMEM."""
    budget = int(0.70 * vmem_cap)
    fixed = 2 * h_pad * (4 * h_pad) * u_bytes_per_elt        # U (x2 buffers)
    fixed += 8 * b_block * h_pad * 4                         # h0/c0 (x2) + h/c carries
    per_t = 2 * b_block * (4 * h_pad) * 4                    # xw block (x2 buffers)
    per_t += 2 * b_block * h_pad * 4                         # hseq block (x2 buffers)
    chosen = 1
    for cand in (2, 4, 8, 16, 32, 64, 128):
        if fixed + cand * per_t <= budget:
            chosen = cand
    t_block = max(1, min(seq_len, chosen))
    return t_block, fixed + t_block * per_t


def _lstm_recurrent_kernel(xw_ref, u_ref, h0_ref, c0_ref,
                           hseq_ref, h_ref, c_ref,
                           *, t_block, h_pad, tail_valid):
    """One grid step = one (batch block, time block).

    xw_ref:   (t_block, b_block, 4*h_pad)  precomputed x@W + bias slab (f32)
    u_ref:    (h_pad, 4*h_pad)             recurrent weights (VMEM resident)
    h0_ref:   (b_block, h_pad)             initial hidden state
    c0_ref:   (b_block, h_pad)             initial cell state
    hseq_ref: (t_block, b_block, h_pad)    per-step hidden outputs
    h_ref:    (b_block, h_pad)             final hidden state == recurrent carry
    c_ref:    (b_block, h_pad)             final cell state   == recurrent carry
    Gate column layout is [i | f | o | g], each of width h_pad.
    """
    t_blk = pl.program_id(1)
    n_t_blocks = pl.num_programs(1)

    @pl.when(t_blk == 0)
    def _init():
        h_ref[...] = h0_ref[...]
        c_ref[...] = c0_ref[...]

    def step(tau):
        # Recurrent projection on the MXU + precomputed input projection slab.
        gates = xw_ref[tau] + jnp.dot(
            h_ref[...].astype(u_ref.dtype), u_ref[...],
            preferred_element_type=jnp.float32)
        sig = jax.nn.sigmoid(gates[:, :3 * h_pad])       # i | f | o in one launch
        i_t = sig[:, 0 * h_pad:1 * h_pad]
        f_t = sig[:, 1 * h_pad:2 * h_pad]
        o_t = sig[:, 2 * h_pad:3 * h_pad]
        g_t = jnp.tanh(gates[:, 3 * h_pad:])
        c_t = f_t * c_ref[...] + i_t * g_t
        h_t = o_t * jnp.tanh(c_t)
        c_ref[...] = c_t
        h_ref[...] = h_t
        hseq_ref[tau] = h_t.astype(hseq_ref.dtype)

    def run_steps(lo, hi):
        n = hi - lo
        if n <= 0:
            return
        if n <= 16:
            for tau in range(lo, hi):       # short: full static unroll
                step(tau)
        else:                               # long: bounded live ranges
            def body(tau, carry):
                step(tau)
                return carry
            jax.lax.fori_loop(lo, hi, body, None, unroll=8)

    # Timesteps valid in EVERY time block: no predication at all.
    run_steps(0, tail_valid)

    # Trailing timesteps exist in every block except the last: one scf.if total.
    if tail_valid < t_block:
        @pl.when(t_blk != n_t_blocks - 1)
        def _tail():
            run_steps(tail_valid, t_block)

        @pl.when(t_blk == n_t_blocks - 1)
        def _zero_pad():
            n_pad = t_block - tail_valid
            hseq_ref[pl.ds(tail_valid, n_pad)] = jnp.zeros(
                (n_pad,) + hseq_ref.shape[1:], hseq_ref.dtype)


def custom_lstm_forward(x, W, U, bias, init_states=None, *,
                        use_bf16_recurrent=False, num_tensorcores=None):
    """x: (bs, seq, D).  Returns (hidden_seq (bs, seq, H), (h_T, c_T))."""
    bs, seq_len, input_dim = x.shape
    hidden_dim = U.shape[0]
    assert W.shape == (input_dim, 4 * hidden_dim)
    assert bias.shape == (4 * hidden_dim,)

    f32 = jnp.float32
    u_dtype = jnp.bfloat16 if use_bf16_recurrent else f32

    # ---- Padded, (8,128)-aligned layout ----------------------------------
    h_pad = _round_up(hidden_dim, 128)        # lane-align each gate block
    bs_pad = _round_up(bs, 8)                 # sublane-align the batch

    # Batch split only when extra TensorCores exist AND each half keeps >= 64
    # MXU rows; otherwise a single batch block (no extra serial grid steps).
    if num_tensorcores is None:
        num_tensorcores = getattr(jax.devices()[0], "num_cores", None) or 1
    if num_tensorcores > 1 and bs_pad >= 128 and (bs_pad // 2) % 8 == 0:
        b_block = bs_pad // 2
    else:
        b_block = bs_pad

    # Generation-aware time block + VMEM budget.
    vmem_cap = _vmem_capacity_bytes()
    t_block, footprint = _pick_time_block(
        seq_len, b_block, h_pad, jnp.dtype(u_dtype).itemsize, vmem_cap)
    seq_pad = _round_up(seq_len, t_block)
    n_t_blocks = seq_pad // t_block
    tail_valid = seq_len - (n_t_blocks - 1) * t_block   # valid steps in last block
    vmem_limit = int(max(32 * 1024 * 1024,
                         min(0.9 * vmem_cap, 2 * footprint + 8 * 1024 * 1024)))

    # ---- Parameters: gate re-layout [i|f|o|g], lane-aligned --------------
    W_p = _relayout_gate_cols(W.astype(f32), hidden_dim, h_pad)      # (D, 4Hp)
    b_p = _relayout_gate_cols(bias.astype(f32), hidden_dim, h_pad)   # (4Hp,)
    U_p = _relayout_gate_cols(U.astype(f32), hidden_dim, h_pad)      # (H, 4Hp)
    U_p = jnp.pad(U_p, ((0, h_pad - hidden_dim), (0, 0)))            # (Hp, 4Hp)
    U_p = U_p.astype(u_dtype)

    if init_states is None:
        h0 = jnp.zeros((bs_pad, h_pad), f32)
        c0 = jnp.zeros((bs_pad, h_pad), f32)
    else:
        h0_in, c0_in = init_states
        pads = ((0, bs_pad - bs), (0, h_pad - hidden_dim))
        h0 = jnp.pad(h0_in.astype(f32), pads)
        c0 = jnp.pad(c0_in.astype(f32), pads)

    # ---- Hoisted input projection: one big matmul for all timesteps ------
    # Transpose x (only D columns) BEFORE the matmul so the (seq, bs, 4Hp) slab
    # is produced directly, with no post-matmul transpose of the wide result.
    x_p = jnp.pad(x.astype(f32),
                  ((0, bs_pad - bs), (0, seq_pad - seq_len), (0, 0)))
    x_tb = jnp.transpose(x_p, (1, 0, 2)).reshape(seq_pad * bs_pad, input_dim)
    xw = jnp.dot(x_tb, W_p, precision=jax.lax.Precision.HIGHEST) + b_p[None, :]
    xw = xw.reshape(seq_pad, bs_pad, 4 * h_pad)

    kernel = functools.partial(
        _lstm_recurrent_kernel,
        t_block=t_block, h_pad=h_pad, tail_valid=tail_valid)

    grid = (bs_pad // b_block, n_t_blocks)

    grid_spec = pltpu.PrefetchScalarGridSpec(
        num_scalar_prefetch=0,
        grid=grid,
        in_specs=[
            pl.BlockSpec((t_block, b_block, 4 * h_pad), lambda b, t: (t, b, 0)),
            pl.BlockSpec((h_pad, 4 * h_pad), lambda b, t: (0, 0)),   # U resident
            pl.BlockSpec((b_block, h_pad), lambda b, t: (b, 0)),     # h0
            pl.BlockSpec((b_block, h_pad), lambda b, t: (b, 0)),     # c0
        ],
        out_specs=[
            pl.BlockSpec((t_block, b_block, h_pad), lambda b, t: (t, b, 0)),
            pl.BlockSpec((b_block, h_pad), lambda b, t: (b, 0)),     # h_T (carry)
            pl.BlockSpec((b_block, h_pad), lambda b, t: (b, 0)),     # c_T (carry)
        ],
    )

    out_shapes = (
        jax.ShapeDtypeStruct((seq_pad, bs_pad, h_pad), f32),   # hidden_seq (padded)
        jax.ShapeDtypeStruct((bs_pad, h_pad), f32),            # h_T (padded)
        jax.ShapeDtypeStruct((bs_pad, h_pad), f32),            # c_T (padded)
    )

    hseq_p, h_T_p, c_T_p = pl.pallas_call(
        kernel,
        out_shape=out_shapes,
        grid_spec=grid_spec,
        compiler_params=pltpu.CompilerParams(
            # batch blocks are independent; the time axis is inherently serial
            dimension_semantics=("parallel", "arbitrary"),
            vmem_limit_bytes=vmem_limit,
        ),
    )(xw, U_p, h0, c0)

    # Final (bs, seq, H) layout mirrors the module's `.transpose(0,1)` epilogue.
    # (Writing (b, t, h) blocks in-kernel was considered but would turn the
    # lane-dense per-step stores into sublane-masked ones; keep the XLA transpose.)
    hidden_seq = jnp.transpose(hseq_p[:seq_len, :bs, :hidden_dim], (1, 0, 2))
    hidden_seq = hidden_seq.astype(x.dtype)
    h_T = h_T_p[:bs, :hidden_dim].astype(x.dtype)
    c_T = c_T_p[:bs, :hidden_dim].astype(x.dtype)
    return hidden_seq, (h_T, c_T)


def _reference_lstm(x, W, U, bias, init_states=None):
    """Pure-JAX reference matching the PyTorch forward exactly."""
    bs, seq_len, _ = x.shape
    HS = U.shape[0]
    hi = jax.lax.Precision.HIGHEST
    if init_states is None:
        h = jnp.zeros((bs, HS), jnp.float32)
        c = jnp.zeros((bs, HS), jnp.float32)
    else:
        h, c = init_states
    hs = []
    for t in range(seq_len):
        gates = (jnp.dot(x[:, t, :], W, precision=hi)
                 + jnp.dot(h, U, precision=hi) + bias)
        i = jax.nn.sigmoid(gates[:, :HS])
        f = jax.nn.sigmoid(gates[:, HS:2 * HS])
        g = jnp.tanh(gates[:, 2 * HS:3 * HS])
        o = jax.nn.sigmoid(gates[:, 3 * HS:])
        c = f * c + i * g
        h = o * jnp.tanh(c)
        hs.append(h)
    return jnp.stack(hs, axis=1), (h, c)


if __name__ == "__main__":
    bs, seq_len, input_dim, hidden_dim = 2, 8, 16, 32

    key = jax.random.PRNGKey(0)
    kx, kw, ku, kb, kh, kc = jax.random.split(key, 6)

    # Deterministic init matching nn.Parameter.uniform_(-stdv, stdv).
    stdv = 1.0 / math.sqrt(hidden_dim)
    W = jax.random.uniform(kw, (input_dim, hidden_dim * 4), jnp.float32, -stdv, stdv)
    U = jax.random.uniform(ku, (hidden_dim, hidden_dim * 4), jnp.float32, -stdv, stdv)
    bias = jax.random.uniform(kb, (hidden_dim * 4,), jnp.float32, -stdv, stdv)
    x = jax.random.normal(kx, (bs, seq_len, input_dim), jnp.float32)

    # ---- default (f32) path: exact parity with the PyTorch forward ----
    fwd = jax.jit(custom_lstm_forward)
    hidden_seq, (h_T, c_T) = fwd(x, W, U, bias)
    jax.block_until_ready((hidden_seq, h_T, c_T))

    ref_seq, (ref_h, ref_c) = _reference_lstm(x, W, U, bias)
    assert hidden_seq.shape == (bs, seq_len, hidden_dim)
    assert h_T.shape == (bs, hidden_dim) and c_T.shape == (bs, hidden_dim)
    assert jnp.allclose(hidden_seq, ref_seq, atol=1e-5, rtol=1e-5)
    assert jnp.allclose(h_T, ref_h, atol=1e-5, rtol=1e-5)
    assert jnp.allclose(c_T, ref_c, atol=1e-5, rtol=1e-5)

    # ---- init_states path ----
    h0 = 0.1 * jax.random.normal(kh, (bs, hidden_dim), jnp.float32)
    c0 = 0.1 * jax.random.normal(kc, (bs, hidden_dim), jnp.float32)
    seq2, (h2, c2) = fwd(x, W, U, bias, (h0, c0))
    jax.block_until_ready((seq2, h2, c2))
    ref2_seq, (ref2_h, ref2_c) = _reference_lstm(x, W, U, bias, (h0, c0))
    assert jnp.allclose(seq2, ref2_seq, atol=1e-5, rtol=1e-5)
    assert jnp.allclose(h2, ref2_h, atol=1e-5, rtol=1e-5)
    assert jnp.allclose(c2, ref2_c, atol=1e-5, rtol=1e-5)

    # ---- optional bf16 recurrent-matmul path (MXU-native; looser tolerance) ----
    fwd_bf16 = jax.jit(functools.partial(custom_lstm_forward, use_bf16_recurrent=True))
    seq_b, (h_b, c_b) = fwd_bf16(x, W, U, bias)
    jax.block_until_ready((seq_b, h_b, c_b))
    assert jnp.allclose(seq_b, ref_seq, atol=5e-2, rtol=5e-2)
    assert jnp.allclose(h_b, ref_h, atol=5e-2, rtol=5e-2)
    assert jnp.allclose(c_b, ref_c, atol=5e-2, rtol=5e-2)

    print("KERNEL_OK")
</pallas_src>

<mosaic_0001>
module attributes {stable_mosaic.version = 11 : i64} {
  func.func @_lstm_recurrent_kernel(%arg0: i32, %arg1: i32, %arg2: memref<8x8x512xf32, #tpu.memory_space<vmem>>, %arg3: memref<128x512xf32, #tpu.memory_space<vmem>>, %arg4: memref<8x128xf32, #tpu.memory_space<vmem>>, %arg5: memref<8x128xf32, #tpu.memory_space<vmem>>, %arg6: memref<8x8x128xf32, #tpu.memory_space<vmem>>, %arg7: memref<8x128xf32, #tpu.memory_space<vmem>>, %arg8: memref<8x128xf32, #tpu.memory_space<vmem>>) attributes {dimension_semantics = [#tpu.dimension_semantics<parallel>, #tpu.dimension_semantics<arbitrary>], iteration_bounds = array<i64: 1, 1>, scalar_prefetch = 0 : i64, scratch_operands = 0 : i64, tpu.core_type = #tpu.core_type<tc>, window_params = [{transform_indices = @transform_0, window_bounds = array<i64: 8, 8, 512>}, {pipeline_mode = #tpu.pipeline_mode<synchronous>, transform_indices = @transform_1, window_bounds = array<i64: 128, 512>}, {transform_indices = @transform_2, window_bounds = array<i64: 8, 128>}, {transform_indices = @transform_3, window_bounds = array<i64: 8, 128>}, {transform_indices = @transform_4, window_bounds = array<i64: 8, 8, 128>}, {transform_indices = @transform_5, window_bounds = array<i64: 8, 128>}, {transform_indices = @transform_6, window_bounds = array<i64: 8, 128>}]} {
    %c0_i32 = arith.constant 0 : i32
    %0 = arith.cmpi eq, %arg1, %c0_i32 : i32
    %1 = arith.extui %0 : i1 to i32
    %c0_i32_0 = arith.constant 0 : i32
    %2 = arith.cmpi ne, %1, %c0_i32_0 : i32
    scf.if %2 {
      %c0_136 = arith.constant 0 : index
      %c0_137 = arith.constant 0 : index
      %227 = vector.load %arg4[%c0_136, %c0_137] : memref<8x128xf32, #tpu.memory_space<vmem>>, vector<8x128xf32>
      %c0_138 = arith.constant 0 : index
      %c0_139 = arith.constant 0 : index
      %228 = vector.load %arg7[%c0_138, %c0_139] : memref<8x128xf32, #tpu.memory_space<vmem>>, vector<8x128xf32>
      tpu.vector_store %arg7[%c0_138, %c0_139], %227 {strides = array<i32>} : memref<8x128xf32, #tpu.memory_space<vmem>>, vector<8x128xf32>,
      %c0_140 = arith.constant 0 : index
      %c0_141 = arith.constant 0 : index
      %229 = vector.load %arg5[%c0_140, %c0_141] : memref<8x128xf32, #tpu.memory_space<vmem>>, vector<8x128xf32>
      %c0_142 = arith.constant 0 : index
      %c0_143 = arith.constant 0 : index
      %230 = vector.load %arg8[%c0_142, %c0_143] : memref<8x128xf32, #tpu.memory_space<vmem>>, vector<8x128xf32>
      tpu.vector_store %arg8[%c0_142, %c0_143], %229 {strides = array<i32>} : memref<8x128xf32, #tpu.memory_space<vmem>>, vector<8x128xf32>,
    } else {
    }
    %c0 = arith.constant 0 : index
    %c0_1 = arith.constant 0 : index
    %c0_2 = arith.constant 0 : index
    %3 = vector.load %arg2[%c0, %c0_1, %c0_2] : memref<8x8x512xf32, #tpu.memory_space<vmem>>, vector<1x8x512xf32>
    %4 = vector.shape_cast %3 : vector<1x8x512xf32> to vector<8x512xf32>
    %c0_3 = arith.constant 0 : index
    %c0_4 = arith.constant 0 : index
    %5 = vector.load %arg7[%c0_3, %c0_4] : memref<8x128xf32, #tpu.memory_space<vmem>>, vector<8x128xf32>
    %c0_5 = arith.constant 0 : index
    %c0_6 = arith.constant 0 : index
    %6 = vector.load %arg3[%c0_5, %c0_6] : memref<128x512xf32, #tpu.memory_space<vmem>>, vector<128x512xf32>
    %cst = arith.constant dense<0.000000e+00> : vector<8x512xf32>
    %7 = tpu.matmul %5, %6, %cst {dimension_numbers = #tpu.dot_dimension_numbers<[1], [0], [0], [1], [0, 0, 1, 1], [], []>} : vector<8x128xf32>, vector<128x512xf32>, vector<8x512xf32> -> vector<8x512xf32>
    %8 = arith.addf %4, %7 : vector<8x512xf32>
    %9 = vector.extract_strided_slice %8 {offsets = [0, 0], sizes = [8, 384], strides = [1, 1]} : vector<8x512xf32> to vector<8x384xf32>
    %10 = arith.negf %9 : vector<8x384xf32>
    %11 = math.exp %10 : vector<8x384xf32>
    %cst_7 = arith.constant 1.000000e+00 : f32
    %12 = vector.broadcast %cst_7 : f32 to vector<8x384xf32>
    %13 = arith.addf %12, %11 : vector<8x384xf32>
    %14 = arith.divf %12, %13 : vector<8x384xf32>
    %15 = vector.extract_strided_slice %14 {offsets = [0, 0], sizes = [8, 128], strides = [1, 1]} : vector<8x384xf32> to vector<8x128xf32>
    %16 = vector.extract_strided_slice %14 {offsets = [0, 128], sizes = [8, 128], strides = [1, 1]} : vector<8x384xf32> to vector<8x128xf32>
    %17 = vector.extract_strided_slice %14 {offsets = [0, 256], sizes = [8, 128], strides = [1, 1]} : vector<8x384xf32> to vector<8x128xf32>
    %18 = vector.extract_strided_slice %8 {offsets = [0, 384], sizes = [8, 128], strides = [1, 1]} : vector<8x512xf32> to vector<8x128xf32>
    %19 = math.tanh %18 : vector<8x128xf32>
    %c0_8 = arith.constant 0 : index
    %c0_9 = arith.constant 0 : index
    %20 = vector.load %arg8[%c0_8, %c0_9] : memref<8x128xf32, #tpu.memory_space<vmem>>, vector<8x128xf32>
    %21 = arith.mulf %16, %20 : vector<8x128xf32>
    %22 = arith.mulf %15, %19 : vector<8x128xf32>
    %23 = arith.addf %21, %22 : vector<8x128xf32>
    %24 = math.tanh %23 : vector<8x128xf32>
    %25 = arith.mulf %17, %24 : vector<8x128xf32>
    %c0_10 = arith.constant 0 : index
    %c0_11 = arith.constant 0 : index
    %26 = vector.load %arg8[%c0_10, %c0_11] : memref<8x128xf32, #tpu.memory_space<vmem>>, vector<8x128xf32>
    tpu.vector_store %arg8[%c0_10, %c0_11], %23 {strides = array<i32>} : memref<8x128xf32, #tpu.memory_space<vmem>>, vector<8x128xf32>,
    %c0_12 = arith.constant 0 : index
    %c0_13 = arith.constant 0 : index
    %27 = vector.load %arg7[%c0_12, %c0_13] : memref<8x128xf32, #tpu.memory_space<vmem>>, vector<8x128xf32>
    tpu.vector_store %arg7[%c0_12, %c0_13], %25 {strides = array<i32>} : memref<8x128xf32, #tpu.memory_space<vmem>>, vector<8x128xf32>,
    %c0_14 = arith.constant 0 : index
    %c0_15 = arith.constant 0 : index
    %c0_16 = arith.constant 0 : index
    %28 = vector.load %arg6[%c0_14, %c0_15, %c0_16] : memref<8x8x128xf32, #tpu.memory_space<vmem>>, vector<1x8x128xf32>
    %29 = vector.shape_cast %28 : vector<1x8x128xf32> to vector<8x128xf32>
    %30 = vector.shape_cast %25 : vector<8x128xf32> to vector<1x8x128xf32>
    tpu.vector_store %arg6[%c0_14, %c0_15, %c0_16], %30 {strides = array<i32>} : memref<8x8x128xf32, #tpu.memory_space<vmem>>, vector<1x8x128xf32>,
    %c1 = arith.constant 1 : index
    %c0_17 = arith.constant 0 : index
    %c0_18 = arith.constant 0 : index
    %31 = vector.load %arg2[%c1, %c0_17, %c0_18] : memref<8x8x512xf32, #tpu.memory_space<vmem>>, vector<1x8x512xf32>
    %32 = vector.shape_cast %31 : vector<1x8x512xf32> to vector<8x512xf32>
    %c0_19 = arith.constant 0 : index
    %c0_20 = arith.constant 0 : index
    %33 = vector.load %arg7[%c0_19, %c0_20] : memref<8x128xf32, #tpu.memory_space<vmem>>, vector<8x128xf32>
    %c0_21 = arith.constant 0 : index
    %c0_22 = arith.constant 0 : index
    %34 = vector.load %arg3[%c0_21, %c0_22] : memref<128x512xf32, #tpu.memory_space<vmem>>, vector<128x512xf32>
    %cst_23 = arith.constant dense<0.000000e+00> : vector<8x512xf32>
    %35 = tpu.matmul %33, %34, %cst_23 {dimension_numbers = #tpu.dot_dimension_numbers<[1], [0], [0], [1], [0, 0, 1, 1], [], []>} : vector<8x128xf32>, vector<128x512xf32>, vector<8x512xf32> -> vector<8x512xf32>
    %36 = arith.addf %32, %35 : vector<8x512xf32>
    %37 = vector.extract_strided_slice %36 {offsets = [0, 0], sizes = [8, 384], strides = [1, 1]} : vector<8x512xf32> to vector<8x384xf32>
    %38 = arith.negf %37 : vector<8x384xf32>
    %39 = math.exp %38 : vector<8x384xf32>
    %cst_24 = arith.constant 1.000000e+00 : f32
    %40 = vector.broadcast %cst_24 : f32 to vector<8x384xf32>
    %41 = arith.addf %40, %39 : vector<8x384xf32>
    %42 = arith.divf %40, %41 : vector<8x384xf32>
    %43 = vector.extract_strided_slice %42 {offsets = [0, 0], sizes = [8, 128], strides = [1, 1]} : vector<8x384xf32> to vector<8x128xf32>
    %44 = vector.extract_strided_slice %42 {offsets = [0, 128], sizes = [8, 128], strides = [1, 1]} : vector<8x384xf32> to vector<8x128xf32>
    %45 = vector.extract_strided_slice %42 {offsets = [0, 256], sizes = [8, 128], strides = [1, 1]} : vector<8x384xf32> to vector<8x128xf32>
    %46 = vector.extract_strided_slice %36 {offsets = [0, 384], sizes = [8, 128], strides = [1, 1]} : vector<8x512xf32> to vector<8x128xf32>
    %47 = math.tanh %46 : vector<8x128xf32>
    %c0_25 = arith.constant 0 : index
    %c0_26 = arith.constant 0 : index
    %48 = vector.load %arg8[%c0_25, %c0_26] : memref<8x128xf32, #tpu.memory_space<vmem>>, vector<8x128xf32>
    %49 = arith.mulf %44, %48 : vector<8x128xf32>
    %50 = arith.mulf %43, %47 : vector<8x128xf32>
    %51 = arith.addf %49, %50 : vector<8x128xf32>
    %52 = math.tanh %51 : vector<8x128xf32>
    %53 = arith.mulf %45, %52 : vector<8x128xf32>
    %c0_27 = arith.constant 0 : index
    %c0_28 = arith.constant 0 : index
    %54 = vector.load %arg8[%c0_27, %c0_28] : memref<8x128xf32, #tpu.memory_space<vmem>>, vector<8x128xf32>
    tpu.vector_store %arg8[%c0_27, %c0_28], %51 {strides = array<i32>} : memref<8x128xf32, #tpu.memory_space<vmem>>, vector<8x128xf32>,
    %c0_29 = arith.constant 0 : index
    %c0_30 = arith.constant 0 : index
    %55 = vector.load %arg7[%c0_29, %c0_30] : memref<8x128xf32, #tpu.memory_space<vmem>>, vector<8x128xf32>
    tpu.vector_store %arg7[%c0_29, %c0_30], %53 {strides = array<i32>} : memref<8x128xf32, #tpu.memory_space<vmem>>, vector<8x128xf32>,
    %c1_31 = arith.constant 1 : index
    %c0_32 = arith.constant 0 : index
    %c0_33 = arith.constant 0 : index
    %56 = vector.load %arg6[%c1_31, %c0_32, %c0_33] : memref<8x8x128xf32, #tpu.memory_space<vmem>>, vector<1x8x128xf32>
    %57 = vector.shape_cast %56 : vector<1x8x128xf32> to vector<8x128xf32>
    %58 = vector.shape_cast %53 : vector<8x128xf32> to vector<1x8x128xf32>
    tpu.vector_store %arg6[%c1_31, %c0_32, %c0_33], %58 {strides = array<i32>} : memref<8x8x128xf32, #tpu.memory_space<vmem>>, vector<1x8x128xf32>,
    %c2 = arith.constant 2 : index
    %c0_34 = arith.constant 0 : index
    %c0_35 = arith.constant 0 : index
    %59 = vector.load %arg2[%c2, %c0_34, %c0_35] : memref<8x8x512xf32, #tpu.memory_space<vmem>>, vector<1x8x512xf32>
    %60 = vector.shape_cast %59 : vector<1x8x512xf32> to vector<8x512xf32>
    %c0_36 = arith.constant 0 : index
    %c0_37 = arith.constant 0 : index
    %61 = vector.load %arg7[%c0_36, %c0_37] : memref<8x128xf32, #tpu.memory_space<vmem>>, vector<8x128xf32>
    %c0_38 = arith.constant 0 : index
    %c0_39 = arith.constant 0 : index
    %62 = vector.load %arg3[%c0_38, %c0_39] : memref<128x512xf32, #tpu.memory_space<vmem>>, vector<128x512xf32>
    %cst_40 = arith.constant dense<0.000000e+00> : vector<8x512xf32>
    %63 = tpu.matmul %61, %62, %cst_40 {dimension_numbers = #tpu.dot_dimension_numbers<[1], [0], [0], [1], [0, 0, 1, 1], [], []>} : vector<8x128xf32>, vector<128x512xf32>, vector<8x512xf32> -> vector<8x512xf32>
    %64 = arith.addf %60, %63 : vector<8x512xf32>
    %65 = vector.extract_strided_slice %64 {offsets = [0, 0], sizes = [8, 384], strides = [1, 1]} : vector<8x512xf32> to vector<8x384xf32>
    %66 = arith.negf %65 : vector<8x384xf32>
    %67 = math.exp %66 : vector<8x384xf32>
    %cst_41 = arith.constant 1.000000e+00 : f32
    %68 = vector.broadcast %cst_41 : f32 to vector<8x384xf32>
    %69 = arith.addf %68, %67 : vector<8x384xf32>
    %70 = arith.divf %68, %69 : vector<8x384xf32>
    %71 = vector.extract_strided_slice %70 {offsets = [0, 0], sizes = [8, 128], strides = [1, 1]} : vector<8x384xf32> to vector<8x128xf32>
    %72 = vector.extract_strided_slice %70 {offsets = [0, 128], sizes = [8, 128], strides = [1, 1]} : vector<8x384xf32> to vector<8x128xf32>
    %73 = vector.extract_strided_slice %70 {offsets = [0, 256], sizes = [8, 128], strides = [1, 1]} : vector<8x384xf32> to vector<8x128xf32>
    %74 = vector.extract_strided_slice %64 {offsets = [0, 384], sizes = [8, 128], strides = [1, 1]} : vector<8x512xf32> to vector<8x128xf32>
    %75 = math.tanh %74 : vector<8x128xf32>
    %c0_42 = arith.constant 0 : index
    %c0_43 = arith.constant 0 : index
    %76 = vector.load %arg8[%c0_42, %c0_43] : memref<8x128xf32, #tpu.memory_space<vmem>>, vector<8x128xf32>
    %77 = arith.mulf %72, %76 : vector<8x128xf32>
    %78 = arith.mulf %71, %75 : vector<8x128xf32>
    %79 = arith.addf %77, %78 : vector<8x128xf32>
    %80 = math.tanh %79 : vector<8x128xf32>
    %81 = arith.mulf %73, %80 : vector<8x128xf32>
    %c0_44 = arith.constant 0 : index
    %c0_45 = arith.constant 0 : index
    %82 = vector.load %arg8[%c0_44, %c0_45] : memref<8x128xf32, #tpu.memory_space<vmem>>, vector<8x128xf32>
    tpu.vector_store %arg8[%c0_44, %c0_45], %79 {strides = array<i32>} : memref<8x128xf32, #tpu.memory_space<vmem>>, vector<8x128xf32>,
    %c0_46 = arith.constant 0 : index
    %c0_47 = arith.constant 0 : index
    %83 = vector.load %arg7[%c0_46, %c0_47] : memref<8x128xf32, #tpu.memory_space<vmem>>, vector<8x128xf32>
    tpu.vector_store %arg7[%c0_46, %c0_47], %81 {strides = array<i32>} : memref<8x128xf32, #tpu.memory_space<vmem>>, vector<8x128xf32>,
    %c2_48 = arith.constant 2 : index
    %c0_49 = arith.constant 0 : index
    %c0_50 = arith.constant 0 : index
    %84 = vector.load %arg6[%c2_48, %c0_49, %c0_50] : memref<8x8x128xf32, #tpu.memory_space<vmem>>, vector<1x8x128xf32>
    %85 = vector.shape_cast %84 : vector<1x8x128xf32> to vector<8x128xf32>
    %86 = vector.shape_cast %81 : vector<8x128xf32> to vector<1x8x128xf32>
    tpu.vector_store %arg6[%c2_48, %c0_49, %c0_50], %86 {strides = array<i32>} : memref<8x8x128xf32, #tpu.memory_space<vmem>>, vector<1x8x128xf32>,
    %c3 = arith.constant 3 : index
    %c0_51 = arith.constant 0 : index
    %c0_52 = arith.constant 0 : index
    %87 = vector.load %arg2[%c3, %c0_51, %c0_52] : memref<8x8x512xf32, #tpu.memory_space<vmem>>, vector<1x8x512xf32>
    %88 = vector.shape_cast %87 : vector<1x8x512xf32> to vector<8x512xf32>
    %c0_53 = arith.constant 0 : index
    %c0_54 = arith.constant 0 : index
    %89 = vector.load %arg7[%c0_53, %c0_54] : memref<8x128xf32, #tpu.memory_space<vmem>>, vector<8x128xf32>
    %c0_55 = arith.constant 0 : index
    %c0_56 = arith.constant 0 : index
    %90 = vector.load %arg3[%c0_55, %c0_56] : memref<128x512xf32, #tpu.memory_space<vmem>>, vector<128x512xf32>
    %cst_57 = arith.constant dense<0.000000e+00> : vector<8x512xf32>
    %91 = tpu.matmul %89, %90, %cst_57 {dimension_numbers = #tpu.dot_dimension_numbers<[1], [0], [0], [1], [0, 0, 1, 1], [], []>} : vector<8x128xf32>, vector<128x512xf32>, vector<8x512xf32> -> vector<8x512xf32>
    %92 = arith.addf %88, %91 : vector<8x512xf32>
    %93 = vector.extract_strided_slice %92 {offsets = [0, 0], sizes = [8, 384], strides = [1, 1]} : vector<8x512xf32> to vector<8x384xf32>
    %94 = arith.negf %93 : vector<8x384xf32>
    %95 = math.exp %94 : vector<8x384xf32>
    %cst_58 = arith.constant 1.000000e+00 : f32
    %96 = vector.broadcast %cst_58 : f32 to vector<8x384xf32>
    %97 = arith.addf %96, %95 : vector<8x384xf32>
    %98 = arith.divf %96, %97 : vector<8x384xf32>
    %99 = vector.extract_strided_slice %98 {offsets = [0, 0], sizes = [8, 128], strides = [1, 1]} : vector<8x384xf32> to vector<8x128xf32>
    %100 = vector.extract_strided_slice %98 {offsets = [0, 128], sizes = [8, 128], strides = [1, 1]} : vector<8x384xf32> to vector<8x128xf32>
    %101 = vector.extract_strided_slice %98 {offsets = [0, 256], sizes = [8, 128], strides = [1, 1]} : vector<8x384xf32> to vector<8x128xf32>
    %102 = vector.extract_strided_slice %92 {offsets = [0, 384], sizes = [8, 128], strides = [1, 1]} : vector<8x512xf32> to vector<8x128xf32>
    %103 = math.tanh %102 : vector<8x128xf32>
    %c0_59 = arith.constant 0 : index
    %c0_60 = arith.constant 0 : index
    %104 = vector.load %arg8[%c0_59, %c0_60] : memref<8x128xf32, #tpu.memory_space<vmem>>, vector<8x128xf32>
    %105 = arith.mulf %100, %104 : vector<8x128xf32>
    %106 = arith.mulf %99, %103 : vector<8x128xf32>
    %107 = arith.addf %105, %106 : vector<8x128xf32>
    %108 = math.tanh %107 : vector<8x128xf32>
    %109 = arith.mulf %101, %108 : vector<8x128xf32>
    %c0_61 = arith.constant 0 : index
    %c0_62 = arith.constant 0 : index
    %110 = vector.load %arg8[%c0_61, %c0_62] : memref<8x128xf32, #tpu.memory_space<vmem>>, vector<8x128xf32>
    tpu.vector_store %arg8[%c0_61, %c0_62], %107 {strides = array<i32>} : memref<8x128xf32, #tpu.memory_space<vmem>>, vector<8x128xf32>,
    %c0_63 = arith.constant 0 : index
    %c0_64 = arith.constant 0 : index
    %111 = vector.load %arg7[%c0_63, %c0_64] : memref<8x128xf32, #tpu.memory_space<vmem>>, vector<8x128xf32>
    tpu.vector_store %arg7[%c0_63, %c0_64], %109 {strides = array<i32>} : memref<8x128xf32, #tpu.memory_space<vmem>>, vector<8x128xf32>,
    %c3_65 = arith.constant 3 : index
    %c0_66 = arith.constant 0 : index
    %c0_67 = arith.constant 0 : index
    %112 = vector.load %arg6[%c3_65, %c0_66, %c0_67] : memref<8x8x128xf32, #tpu.memory_space<vmem>>, vector<1x8x128xf32>
    %113 = vector.shape_cast %112 : vector<1x8x128xf32> to vector<8x128xf32>
    %114 = vector.shape_cast %109 : vector<8x128xf32> to vector<1x8x128xf32>
    tpu.vector_store %arg6[%c3_65, %c0_66, %c0_67], %114 {strides = array<i32>} : memref<8x8x128xf32, #tpu.memory_space<vmem>>, vector<1x8x128xf32>,
    %c4 = arith.constant 4 : index
    %c0_68 = arith.constant 0 : index
    %c0_69 = arith.constant 0 : index
    %115 = vector.load %arg2[%c4, %c0_68, %c0_69] : memref<8x8x512xf32, #tpu.memory_space<vmem>>, vector<1x8x512xf32>
    %116 = vector.shape_cast %115 : vector<1x8x512xf32> to vector<8x512xf32>
    %c0_70 = arith.constant 0 : index
    %c0_71 = arith.constant 0 : index
    %117 = vector.load %arg7[%c0_70, %c0_71] : memref<8x128xf32, #tpu.memory_space<vmem>>, vector<8x128xf32>
    %c0_72 = arith.constant 0 : index
    %c0_73 = arith.constant 0 : index
    %118 = vector.load %arg3[%c0_72, %c0_73] : memref<128x512xf32, #tpu.memory_space<vmem>>, vector<128x512xf32>
    %cst_74 = arith.constant dense<0.000000e+00> : vector<8x512xf32>
    %119 = tpu.matmul %117, %118, %cst_74 {dimension_numbers = #tpu.dot_dimension_numbers<[1], [0], [0], [1], [0, 0, 1, 1], [], []>} : vector<8x128xf32>, vector<128x512xf32>, vector<8x512xf32> -> vector<8x512xf32>
    %120 = arith.addf %116, %119 : vector<8x512xf32>
    %121 = vector.extract_strided_slice %120 {offsets = [0, 0], sizes = [8, 384], strides = [1, 1]} : vector<8x512xf32> to vector<8x384xf32>
    %122 = arith.negf %121 : vector<8x384xf32>
    %123 = math.exp %122 : vector<8x384xf32>
    %cst_75 = arith.constant 1.000000e+00 : f32
    %124 = vector.broadcast %cst_75 : f32 to vector<8x384xf32>
    %125 = arith.addf %124, %123 : vector<8x384xf32>
    %126 = arith.divf %124, %125 : vector<8x384xf32>
    %127 = vector.extract_strided_slice %126 {offsets = [0, 0], sizes = [8, 128], strides = [1, 1]} : vector<8x384xf32> to vector<8x128xf32>
    %128 = vector.extract_strided_slice %126 {offsets = [0, 128], sizes = [8, 128], strides = [1, 1]} : vector<8x384xf32> to vector<8x128xf32>
    %129 = vector.extract_strided_slice %126 {offsets = [0, 256], sizes = [8, 128], strides = [1, 1]} : vector<8x384xf32> to vector<8x128xf32>
    %130 = vector.extract_strided_slice %120 {offsets = [0, 384], sizes = [8, 128], strides = [1, 1]} : vector<8x512xf32> to vector<8x128xf32>
    %131 = math.tanh %130 : vector<8x128xf32>
    %c0_76 = arith.constant 0 : index
    %c0_77 = arith.constant 0 : index
    %132 = vector.load %arg8[%c0_76, %c0_77] : memref<8x128xf32, #tpu.memory_space<vmem>>, vector<8x128xf32>
    %133 = arith.mulf %128, %132 : vector<8x128xf32>
    %134 = arith.mulf %127, %131 : vector<8x128xf32>
    %135 = arith.addf %133, %134 : vector<8x128xf32>
    %136 = math.tanh %135 : vector<8x128xf32>
    %137 = arith.mulf %129, %136 : vector<8x128xf32>
    %c0_78 = arith.constant 0 : index
    %c0_79 = arith.constant 0 : index
    %138 = vector.load %arg8[%c0_78, %c0_79] : memref<8x128xf32, #tpu.memory_space<vmem>>, vector<8x128xf32>
    tpu.vector_store %arg8[%c0_78, %c0_79], %135 {strides = array<i32>} : memref<8x128xf32, #tpu.memory_space<vmem>>, vector<8x128xf32>,
    %c0_80 = arith.constant 0 : index
    %c0_81 = arith.constant 0 : index
    %139 = vector.load %arg7[%c0_80, %c0_81] : memref<8x128xf32, #tpu.memory_space<vmem>>, vector<8x128xf32>
    tpu.vector_store %arg7[%c0_80, %c0_81], %137 {strides = array<i32>} : memref<8x128xf32, #tpu.memory_space<vmem>>, vector<8x128xf32>,
    %c4_82 = arith.constant 4 : index
    %c0_83 = arith.constant 0 : index
    %c0_84 = arith.constant 0 : index
    %140 = vector.load %arg6[%c4_82, %c0_83, %c0_84] : memref<8x8x128xf32, #tpu.memory_space<vmem>>, vector<1x8x128xf32>
    %141 = vector.shape_cast %140 : vector<1x8x128xf32> to vector<8x128xf32>
    %142 = vector.shape_cast %137 : vector<8x128xf32> to vector<1x8x128xf32>
    tpu.vector_store %arg6[%c4_82, %c0_83, %c0_84], %142 {strides = array<i32>} : memref<8x8x128xf32, #tpu.memory_space<vmem>>, vector<1x8x128xf32>,
    %c5 = arith.constant 5 : index
    %c0_85 = arith.constant 0 : index
    %c0_86 = arith.constant 0 : index
    %143 = vector.load %arg2[%c5, %c0_85, %c0_86] : memref<8x8x512xf32, #tpu.memory_space<vmem>>, vector<1x8x512xf32>
    %144 = vector.shape_cast %143 : vector<1x8x512xf32> to vector<8x512xf32>
    %c0_87 = arith.constant 0 : index
    %c0_88 = arith.constant 0 : index
    %145 = vector.load %arg7[%c0_87, %c0_88] : memref<8x128xf32, #tpu.memory_space<vmem>>, vector<8x128xf32>
    %c0_89 = arith.constant 0 : index
    %c0_90 = arith.constant 0 : index
    %146 = vector.load %arg3[%c0_89, %c0_90] : memref<128x512xf32, #tpu.memory_space<vmem>>, vector<128x512xf32>
    %cst_91 = arith.constant dense<0.000000e+00> : vector<8x512xf32>
    %147 = tpu.matmul %145, %146, %cst_91 {dimension_numbers = #tpu.dot_dimension_numbers<[1], [0], [0], [1], [0, 0, 1, 1], [], []>} : vector<8x128xf32>, vector<128x512xf32>, vector<8x512xf32> -> vector<8x512xf32>
    %148 = arith.addf %144, %147 : vector<8x512xf32>
    %149 = vector.extract_strided_slice %148 {offsets = [0, 0], sizes = [8, 384], strides = [1, 1]} : vector<8x512xf32> to vector<8x384xf32>
    %150 = arith.negf %149 : vector<8x384xf32>
    %151 = math.exp %150 : vector<8x384xf32>
    %cst_92 = arith.constant 1.000000e+00 : f32
    %152 = vector.broadcast %cst_92 : f32 to vector<8x384xf32>
    %153 = arith.addf %152, %151 : vector<8x384xf32>
    %154 = arith.divf %152, %153 : vector<8x384xf32>
    %155 = vector.extract_strided_slice %154 {offsets = [0, 0], sizes = [8, 128], strides = [1, 1]} : vector<8x384xf32> to vector<8x128xf32>
    %156 = vector.extract_strided_slice %154 {offsets = [0, 128], sizes = [8, 128], strides = [1, 1]} : vector<8x384xf32> to vector<8x128xf32>
    %157 = vector.extract_strided_slice %154 {offsets = [0, 256], sizes = [8, 128], strides = [1, 1]} : vector<8x384xf32> to vector<8x128xf32>
    %158 = vector.extract_strided_slice %148 {offsets = [0, 384], sizes = [8, 128], strides = [1, 1]} : vector<8x512xf32> to vector<8x128xf32>
    %159 = math.tanh %158 : vector<8x128xf32>
    %c0_93 = arith.constant 0 : index
    %c0_94 = arith.constant 0 : index
    %160 = vector.load %arg8[%c0_93, %c0_94] : memref<8x128xf32, #tpu.memory_space<vmem>>, vector<8x128xf32>
    %161 = arith.mulf %156, %160 : vector<8x128xf32>
    %162 = arith.mulf %155, %159 : vector<8x128xf32>
    %163 = arith.addf %161, %162 : vector<8x128xf32>
    %164 = math.tanh %163 : vector<8x128xf32>
    %165 = arith.mulf %157, %164 : vector<8x128xf32>
    %c0_95 = arith.constant 0 : index
    %c0_96 = arith.constant 0 : index
    %166 = vector.load %arg8[%c0_95, %c0_96] : memref<8x128xf32, #tpu.memory_space<vmem>>, vector<8x128xf32>
    tpu.vector_store %arg8[%c0_95, %c0_96], %163 {strides = array<i32>} : memref<8x128xf32, #tpu.memory_space<vmem>>, vector<8x128xf32>,
    %c0_97 = arith.constant 0 : index
    %c0_98 = arith.constant 0 : index
    %167 = vector.load %arg7[%c0_97, %c0_98] : memref<8x128xf32, #tpu.memory_space<vmem>>, vector<8x128xf32>
    tpu.vector_store %arg7[%c0_97, %c0_98], %165 {strides = array<i32>} : memref<8x128xf32, #tpu.memory_space<vmem>>, vector<8x128xf32>,
    %c5_99 = arith.constant 5 : index
    %c0_100 = arith.constant 0 : index
    %c0_101 = arith.constant 0 : index
    %168 = vector.load %arg6[%c5_99, %c0_100, %c0_101] : memref<8x8x128xf32, #tpu.memory_space<vmem>>, vector<1x8x128xf32>
    %169 = vector.shape_cast %168 : vector<1x8x128xf32> to vector<8x128xf32>
    %170 = vector.shape_cast %165 : vector<8x128xf32> to vector<1x8x128xf32>
    tpu.vector_store %arg6[%c5_99, %c0_100, %c0_101], %170 {strides = array<i32>} : memref<8x8x128xf32, #tpu.memory_space<vmem>>, vector<1x8x128xf32>,
    %c6 = arith.constant 6 : index
    %c0_102 = arith.constant 0 : index
    %c0_103 = arith.constant 0 : index
    %171 = vector.load %arg2[%c6, %c0_102, %c0_103] : memref<8x8x512xf32, #tpu.memory_space<vmem>>, vector<1x8x512xf32>
    %172 = vector.shape_cast %171 : vector<1x8x512xf32> to vector<8x512xf32>
    %c0_104 = arith.constant 0 : index
    %c0_105 = arith.constant 0 : index
    %173 = vector.load %arg7[%c0_104, %c0_105] : memref<8x128xf32, #tpu.memory_space<vmem>>, vector<8x128xf32>
    %c0_106 = arith.constant 0 : index
    %c0_107 = arith.constant 0 : index
    %174 = vector.load %arg3[%c0_106, %c0_107] : memref<128x512xf32, #tpu.memory_space<vmem>>, vector<128x512xf32>
    %cst_108 = arith.constant dense<0.000000e+00> : vector<8x512xf32>
    %175 = tpu.matmul %173, %174, %cst_108 {dimension_numbers = #tpu.dot_dimension_numbers<[1], [0], [0], [1], [0, 0, 1, 1], [], []>} : vector<8x128xf32>, vector<128x512xf32>, vector<8x512xf32> -> vector<8x512xf32>
    %176 = arith.addf %172, %175 : vector<8x512xf32>
    %177 = vector.extract_strided_slice %176 {offsets = [0, 0], sizes = [8, 384], strides = [1, 1]} : vector<8x512xf32> to vector<8x384xf32>
    %178 = arith.negf %177 : vector<8x384xf32>
    %179 = math.exp %178 : vector<8x384xf32>
    %cst_109 = arith.constant 1.000000e+00 : f32
    %180 = vector.broadcast %cst_109 : f32 to vector<8x384xf32>
    %181 = arith.addf %180, %179 : vector<8x384xf32>
    %182 = arith.divf %180, %181 : vector<8x384xf32>
    %183 = vector.extract_strided_slice %182 {offsets = [0, 0], sizes = [8, 128], strides = [1, 1]} : vector<8x384xf32> to vector<8x128xf32>
    %184 = vector.extract_strided_slice %182 {offsets = [0, 128], sizes = [8, 128], strides = [1, 1]} : vector<8x384xf32> to vector<8x128xf32>
    %185 = vector.extract_strided_slice %182 {offsets = [0, 256], sizes = [8, 128], strides = [1, 1]} : vector<8x384xf32> to vector<8x128xf32>
    %186 = vector.extract_strided_slice %176 {offsets = [0, 384], sizes = [8, 128], strides = [1, 1]} : vector<8x512xf32> to vector<8x128xf32>
    %187 = math.tanh %186 : vector<8x128xf32>
    %c0_110 = arith.constant 0 : index
    %c0_111 = arith.constant 0 : index
    %188 = vector.load %arg8[%c0_110, %c0_111] : memref<8x128xf32, #tpu.memory_space<vmem>>, vector<8x128xf32>
    %189 = arith.mulf %184, %188 : vector<8x128xf32>
    %190 = arith.mulf %183, %187 : vector<8x128xf32>
    %191 = arith.addf %189, %190 : vector<8x128xf32>
    %192 = math.tanh %191 : vector<8x128xf32>
    %193 = arith.mulf %185, %192 : vector<8x128xf32>
    %c0_112 = arith.constant 0 : index
    %c0_113 = arith.constant 0 : index
    %194 = vector.load %arg8[%c0_112, %c0_113] : memref<8x128xf32, #tpu.memory_space<vmem>>, vector<8x128xf32>
    tpu.vector_store %arg8[%c0_112, %c0_113], %191 {strides = array<i32>} : memref<8x128xf32, #tpu.memory_space<vmem>>, vector<8x128xf32>,
    %c0_114 = arith.constant 0 : index
    %c0_115 = arith.constant 0 : index
    %195 = vector.load %arg7[%c0_114, %c0_115] : memref<8x128xf32, #tpu.memory_space<vmem>>, vector<8x128xf32>
    tpu.vector_store %arg7[%c0_114, %c0_115], %193 {strides = array<i32>} : memref<8x128xf32, #tpu.memory_space<vmem>>, vector<8x128xf32>,
    %c6_116 = arith.constant 6 : index
    %c0_117 = arith.constant 0 : index
    %c0_118 = arith.constant 0 : index
    %196 = vector.load %arg6[%c6_116, %c0_117, %c0_118] : memref<8x8x128xf32, #tpu.memory_space<vmem>>, vector<1x8x128xf32>
    %197 = vector.shape_cast %196 : vector<1x8x128xf32> to vector<8x128xf32>
    %198 = vector.shape_cast %193 : vector<8x128xf32> to vector<1x8x128xf32>
    tpu.vector_store %arg6[%c6_116, %c0_117, %c0_118], %198 {strides = array<i32>} : memref<8x8x128xf32, #tpu.memory_space<vmem>>, vector<1x8x128xf32>,
    %c7 = arith.constant 7 : index
    %c0_119 = arith.constant 0 : index
    %c0_120 = arith.constant 0 : index
    %199 = vector.load %arg2[%c7, %c0_119, %c0_120] : memref<8x8x512xf32, #tpu.memory_space<vmem>>, vector<1x8x512xf32>
    %200 = vector.shape_cast %199 : vector<1x8x512xf32> to vector<8x512xf32>
    %c0_121 = arith.constant 0 : index
    %c0_122 = arith.constant 0 : index
    %201 = vector.load %arg7[%c0_121, %c0_122] : memref<8x128xf32, #tpu.memory_space<vmem>>, vector<8x128xf32>
    %c0_123 = arith.constant 0 : index
    %c0_124 = arith.constant 0 : index
    %202 = vector.load %arg3[%c0_123, %c0_124] : memref<128x512xf32, #tpu.memory_space<vmem>>, vector<128x512xf32>
    %cst_125 = arith.constant dense<0.000000e+00> : vector<8x512xf32>
    %203 = tpu.matmul %201, %202, %cst_125 {dimension_numbers = #tpu.dot_dimension_numbers<[1], [0], [0], [1], [0, 0, 1, 1], [], []>} : vector<8x128xf32>, vector<128x512xf32>, vector<8x512xf32> -> vector<8x512xf32>
    %204 = arith.addf %200, %203 : vector<8x512xf32>
    %205 = vector.extract_strided_slice %204 {offsets = [0, 0], sizes = [8, 384], strides = [1, 1]} : vector<8x512xf32> to vector<8x384xf32>
    %206 = arith.negf %205 : vector<8x384xf32>
    %207 = math.exp %206 : vector<8x384xf32>
    %cst_126 = arith.constant 1.000000e+00 : f32
    %208 = vector.broadcast %cst_126 : f32 to vector<8x384xf32>
    %209 = arith.addf %208, %207 : vector<8x384xf32>
    %210 = arith.divf %208, %209 : vector<8x384xf32>
    %211 = vector.extract_strided_slice %210 {offsets = [0, 0], sizes = [8, 128], strides = [1, 1]} : vector<8x384xf32> to vector<8x128xf32>
    %212 = vector.extract_strided_slice %210 {offsets = [0, 128], sizes = [8, 128], strides = [1, 1]} : vector<8x384xf32> to vector<8x128xf32>
    %213 = vector.extract_strided_slice %210 {offsets = [0, 256], sizes = [8, 128], strides = [1, 1]} : vector<8x384xf32> to vector<8x128xf32>
    %214 = vector.extract_strided_slice %204 {offsets = [0, 384], sizes = [8, 128], strides = [1, 1]} : vector<8x512xf32> to vector<8x128xf32>
    %215 = math.tanh %214 : vector<8x128xf32>
    %c0_127 = arith.constant 0 : index
    %c0_128 = arith.constant 0 : index
    %216 = vector.load %arg8[%c0_127, %c0_128] : memref<8x128xf32, #tpu.memory_space<vmem>>, vector<8x128xf32>
    %217 = arith.mulf %212, %216 : vector<8x128xf32>
    %218 = arith.mulf %211, %215 : vector<8x128xf32>
    %219 = arith.addf %217, %218 : vector<8x128xf32>
    %220 = math.tanh %219 : vector<8x128xf32>
    %221 = arith.mulf %213, %220 : vector<8x128xf32>
    %c0_129 = arith.constant 0 : index
    %c0_130 = arith.constant 0 : index
    %222 = vector.load %arg8[%c0_129, %c0_130] : memref<8x128xf32, #tpu.memory_space<vmem>>, vector<8x128xf32>
    tpu.vector_store %arg8[%c0_129, %c0_130], %219 {strides = array<i32>} : memref<8x128xf32, #tpu.memory_space<vmem>>, vector<8x128xf32>,
    %c0_131 = arith.constant 0 : index
    %c0_132 = arith.constant 0 : index
    %223 = vector.load %arg7[%c0_131, %c0_132] : memref<8x128xf32, #tpu.memory_space<vmem>>, vector<8x128xf32>
    tpu.vector_store %arg7[%c0_131, %c0_132], %221 {strides = array<i32>} : memref<8x128xf32, #tpu.memory_space<vmem>>, vector<8x128xf32>,
    %c7_133 = arith.constant 7 : index
    %c0_134 = arith.constant 0 : index
    %c0_135 = arith.constant 0 : index
    %224 = vector.load %arg6[%c7_133, %c0_134, %c0_135] : memref<8x8x128xf32, #tpu.memory_space<vmem>>, vector<1x8x128xf32>
    %225 = vector.shape_cast %224 : vector<1x8x128xf32> to vector<8x128xf32>
    %226 = vector.shape_cast %221 : vector<8x128xf32> to vector<1x8x128xf32>
    tpu.vector_store %arg6[%c7_133, %c0_134, %c0_135], %226 {strides = array<i32>} : memref<8x8x128xf32, #tpu.memory_space<vmem>>, vector<1x8x128xf32>,
    return
  }
  func.func @transform_0(%arg0: i32, %arg1: i32) -> (i32, i32, i32) {
    %c0_i32 = arith.constant 0 : i32
    %c0_i32_0 = arith.constant 0 : i32
    return %arg1, %arg0, %c0_i32 : i32, i32, i32
  }
  func.func @transform_1(%arg0: i32, %arg1: i32) -> (i32, i32) {
    %c0_i32 = arith.constant 0 : i32
    %c0_i32_0 = arith.constant 0 : i32
    %c0_i32_1 = arith.constant 0 : i32
    return %c0_i32, %c0_i32_0 : i32, i32
  }
  func.func @transform_2(%arg0: i32, %arg1: i32) -> (i32, i32) {
    %c0_i32 = arith.constant 0 : i32
    %c0_i32_0 = arith.constant 0 : i32
    return %arg0, %c0_i32 : i32, i32
  }
  func.func @transform_3(%arg0: i32, %arg1: i32) -> (i32, i32) {
    %c0_i32 = arith.constant 0 : i32
    %c0_i32_0 = arith.constant 0 : i32
    return %arg0, %c0_i32 : i32, i32
  }
  func.func @transform_4(%arg0: i32, %arg1: i32) -> (i32, i32, i32) {
    %c0_i32 = arith.constant 0 : i32
    %c0_i32_0 = arith.constant 0 : i32
    return %arg1, %arg0, %c0_i32 : i32, i32, i32
  }
  func.func @transform_5(%arg0: i32, %arg1: i32) -> (i32, i32) {
    %c0_i32 = arith.constant 0 : i32
    %c0_i32_0 = arith.constant 0 : i32
    return %arg0, %c0_i32 : i32, i32
  }
  func.func @transform_6(%arg0: i32, %arg1: i32) -> (i32, i32) {
    %c0_i32 = arith.constant 0 : i32
    %c0_i32_0 = arith.constant 0 : i32
    return %arg0, %c0_i32 : i32, i32
  }
}

</mosaic_0001>

<llo_original>
// kernel: custom_lstm_forward.1
$region0: #{custom_lstm_forward.1}
  #allocation0 [shape = 'u32[]', space=smem, size = 0x4, offset = 0x4, fixed_abs, tag = 'smem constant byte address 0x4 - core index']
  #allocation1 [shape = 'u32[72,128]{1,0:T(1,128)}', space=vmem, size = 0x9000, scoped, tag = 'internal scratch']
  %s0 = inlined_call_operand.vmem [shape: f32[8,8,512], index: 0, kind: input, shape index: {}]
  %s1 = inlined_call_operand.vmem [shape: f32[128,512], index: 1, kind: input, shape index: {}]
  %s2 = inlined_call_operand.vmem [shape: f32[8,128], index: 2, kind: input, shape index: {}, may-alias: {2,3}]
  %s3 = inlined_call_operand.vmem [shape: f32[8,128], index: 3, kind: input, shape index: {}, may-alias: {2,3}]
  %s4 = inlined_call_operand.vmem [shape: f32[8,8,128], index: 4, kind: output, shape index: {0}]
  %s5 = inlined_call_operand.vmem [shape: f32[8,128], index: 5, kind: output, shape index: {1}]
  %s6 = inlined_call_operand.vmem [shape: f32[8,128], index: 6, kind: output, shape index: {2}]
  %7 = xla_tuple %s4, %s5, %s6
  %s8 = sld [smem:[#allocation0]]
  $region46: #{custom_lstm_forward.1} parent=0
    _
  %s10 = ssub.s32 1, %s8
  %s11 = scalar_select 0, %s10, %s8
  // Predicated region
  $region2: #{custom_lstm_forward.1} parent=0 // pred_check
    _
  $region3: #{custom_lstm_forward.1} parent=0 // pred_check_branch
    %13 = sbr.rel (0) target = $region5
  $region4: #{custom_lstm_forward.1} parent=0 // pred_region
    _
  $region5: #{custom_lstm_forward.1} parent=0 // pred_fallthru
    _
  // Predicated region
  $region6: #{custom_lstm_forward.1} parent=0 // pred_check
    _
  $region7: #{custom_lstm_forward.1} parent=0 // pred_check_branch
    %15 = sbr.rel (0) target = $region9
  $region8: #{custom_lstm_forward.1} parent=0 // pred_region
    _
  $region9: #{custom_lstm_forward.1} parent=0 // pred_fallthru
    _
  // Predicated region
  $region10: #{custom_lstm_forward.1} parent=0 // pred_check
    _
  $region11: #{custom_lstm_forward.1} parent=0 // pred_check_branch
    %17 = sbr.rel (0) target = $region13
  $region12: #{custom_lstm_forward.1} parent=0 // pred_region
    _
  $region13: #{custom_lstm_forward.1} parent=0 // pred_fallthru
    _
  // Predicated region
  $region14: #{custom_lstm_forward.1} parent=0 // pred_check
    _
  $region15: #{custom_lstm_forward.1} parent=0 // pred_check_branch
    %19 = sbr.rel (0) target = $region17
  $region16: #{custom_lstm_forward.1} parent=0 // pred_region
    _
  $region17: #{custom_lstm_forward.1} parent=0 // pred_fallthru
    _
  %p20 = scmp.eq.s32.totalorder 0, 0
  // Predicated region
  $region18: #{custom_lstm_forward.1} parent=0 // pred_check
    %p21 = pneg %p20
  $region19: #{custom_lstm_forward.1} parent=0 // pred_check_branch
    %23 = sbr.rel (%p21) target = $region21
  $region20: #{custom_lstm_forward.1} parent=0 // pred_region
    %v24 = vld [vmem:[%s2] sm:$0xff]
    %25 = vst [vmem:[%s5] sm:$0xff] %v24
    %v26 = vld [vmem:[%s3] sm:$0xff]
    %27 = vst [vmem:[%s6] sm:$0xff] %v26
  $region21: #{custom_lstm_forward.1} parent=0 // pred_fallthru
    _
  %v28 = vld [vmem:[%s0] sm:$0xff]
  %v29 = vld [vmem:[%s0 + $0x8] sm:$0xff]
  %v30 = vld [vmem:[%s0 + $0x10] sm:$0xff]
  %v31 = vld [vmem:[%s0 + $0x18] sm:$0xff]
  %v32 = vld [vmem:[%s5] sm:$0xff]
  %v33 = vld [vmem:[%s1] sm:$0xff]
  %v34 = vld [vmem:[%s1 + $0x8] sm:$0xff]
  %v35 = vld [vmem:[%s1 + $0x10] sm:$0xff]
  %v36 = vld [vmem:[%s1 + $0x18] sm:$0xff]
  %v37 = vld [vmem:[%s1 + $0x20] sm:$0xff]
  %v38 = vld [vmem:[%s1 + $0x28] sm:$0xff]
  %v39 = vld [vmem:[%s1 + $0x30] sm:$0xff]
  %v40 = vld [vmem:[%s1 + $0x38] sm:$0xff]
  %v41 = vld [vmem:[%s1 + $0x40] sm:$0xff]
  %v42 = vld [vmem:[%s1 + $0x48] sm:$0xff]
  %v43 = vld [vmem:[%s1 + $0x50] sm:$0xff]
  %v44 = vld [vmem:[%s1 + $0x58] sm:$0xff]
  %v45 = vld [vmem:[%s1 + $0x60] sm:$0xff]
  %v46 = vld [vmem:[%s1 + $0x68] sm:$0xff]
  %v47 = vld [vmem:[%s1 + $0x70] sm:$0xff]
  %v48 = vld [vmem:[%s1 + $0x78] sm:$0xff]
  %v49 = vld [vmem:[%s1 + $0x80] sm:$0xff]
  %v50 = vld [vmem:[%s1 + $0x88] sm:$0xff]
  %v51 = vld [vmem:[%s1 + $0x90] sm:$0xff]
  %v52 = vld [vmem:[%s1 + $0x98] sm:$0xff]
  %v53 = vld [vmem:[%s1 + $0xa0] sm:$0xff]
  %v54 = vld [vmem:[%s1 + $0xa8] sm:$0xff]
  %v55 = vld [vmem:[%s1 + $0xb0] sm:$0xff]
  %v56 = vld [vmem:[%s1 + $0xb8] sm:$0xff]
  %v57 = vld [vmem:[%s1 + $0xc0] sm:$0xff]
  %v58 = vld [vmem:[%s1 + $0xc8] sm:$0xff]
  %v59 = vld [vmem:[%s1 + $0xd0] sm:$0xff]
  %v60 = vld [vmem:[%s1 + $0xd8] sm:$0xff]
  %v61 = vld [vmem:[%s1 + $0xe0] sm:$0xff]
  %v62 = vld [vmem:[%s1 + $0xe8] sm:$0xff]
  %v63 = vld [vmem:[%s1 + $0xf0] sm:$0xff]
  %v64 = vld [vmem:[%s1 + $0xf8] sm:$0xff]
  %v65 = vld [vmem:[%s1 + $0x100] sm:$0xff]
  %v66 = vld [vmem:[%s1 + $0x108] sm:$0xff]
  %v67 = vld [vmem:[%s1 + $0x110] sm:$0xff]
  %v68 = vld [vmem:[%s1 + $0x118] sm:$0xff]
  %v69 = vld [vmem:[%s1 + $0x120] sm:$0xff]
  %v70 = vld [vmem:[%s1 + $0x128] sm:$0xff]
  %v71 = vld [vmem:[%s1 + $0x130] sm:$0xff]
  %v72 = vld [vmem:[%s1 + $0x138] sm:$0xff]
  %v73 = vld [vmem:[%s1 + $0x140] sm:$0xff]
  %v74 = vld [vmem:[%s1 + $0x148] sm:$0xff]
  %v75 = vld [vmem:[%s1 + $0x150] sm:$0xff]
  %v76 = vld [vmem:[%s1 + $0x158] sm:$0xff]
  %v77 = vld [vmem:[%s1 + $0x160] sm:$0xff]
  %v78 = vld [vmem:[%s1 + $0x168] sm:$0xff]
  %v79 = vld [vmem:[%s1 + $0x170] sm:$0xff]
  %v80 = vld [vmem:[%s1 + $0x178] sm:$0xff]
  %v81 = vld [vmem:[%s1 + $0x180] sm:$0xff]
  %v82 = vld [vmem:[%s1 + $0x188] sm:$0xff]
  %v83 = vld [vmem:[%s1 + $0x190] sm:$0xff]
  %v84 = vld [vmem:[%s1 + $0x198] sm:$0xff]
  %v85 = vld [vmem:[%s1 + $0x1a0] sm:$0xff]
  %v86 = vld [vmem:[%s1 + $0x1a8] sm:$0xff]
  %v87 = vld [vmem:[%s1 + $0x1b0] sm:$0xff]
  %v88 = vld [vmem:[%s1 + $0x1b8] sm:$0xff]
  %v89 = vld [vmem:[%s1 + $0x1c0] sm:$0xff]
  %v90 = vld [vmem:[%s1 + $0x1c8] sm:$0xff]
  %v91 = vld [vmem:[%s1 + $0x1d0] sm:$0xff]
  %v92 = vld [vmem:[%s1 + $0x1d8] sm:$0xff]
  %v93 = vld [vmem:[%s1 + $0x1e0] sm:$0xff]
  %v94 = vld [vmem:[%s1 + $0x1e8] sm:$0xff]
  %v95 = vld [vmem:[%s1 + $0x1f0] sm:$0xff]
  %v96 = vld [vmem:[%s1 + $0x1f8] sm:$0xff]
  %97 = vmatpush.msra.mxu0 %v93
  %98 = vmatpush.msra.mxu0 %v89
  %99 = vmatpush.msra.mxu0 %v85
  %100 = vmatpush.msra.mxu0 %v81
  %101 = vmatpush.msra.mxu0 %v77
  %102 = vmatpush.msra.mxu0 %v73
  %103 = vmatpush.msra.mxu0 %v69
  %104 = vmatpush.msra.mxu0 %v65
  %105 = vmatpush.msra.mxu0 %v61
  %106 = vmatpush.msra.mxu0 %v57
  %107 = vmatpush.msra.mxu0 %v53
  %108 = vmatpush.msra.mxu0 %v49
  %109 = vmatpush.msra.mxu0 %v45
  %110 = vmatpush.msra.mxu0 %v41
  %111 = vmatpush.msra.mxu0 %v37
  %112 = vmatpush.msra.mxu0 %v33
  %113 = vmatmul.f32.gmra.mxu0 %v32
  %v114 = vpop.f32.mrf.mxu0
  %v115 = vadd.f32 0.0, %v114
  %116 = vdwg.mxu0
  %117 = vmatpush.msra.mxu0 %v94
  %118 = vmatpush.msra.mxu0 %v90
  %119 = vmatpush.msra.mxu0 %v86
  %120 = vmatpush.msra.mxu0 %v82
  %121 = vmatpush.msra.mxu0 %v78
  %122 = vmatpush.msra.mxu0 %v74
  %123 = vmatpush.msra.mxu0 %v70
  %124 = vmatpush.msra.mxu0 %v66
  %125 = vmatpush.msra.mxu0 %v62
  %126 = vmatpush.msra.mxu0 %v58
  %127 = vmatpush.msra.mxu0 %v54
  %128 = vmatpush.msra.mxu0 %v50
  %129 = vmatpush.msra.mxu0 %v46
  %130 = vmatpush.msra.mxu0 %v42
  %131 = vmatpush.msra.mxu0 %v38
  %132 = vmatpush.msra.mxu0 %v34
  %133 = vmatmul.f32.gmra.mxu0 %v32
  %v134 = vpop.f32.mrf.mxu0
  %v135 = vadd.f32 0.0, %v134
  %136 = vdwg.mxu0
  %137 = vmatpush.msra.mxu0 %v95
  %138 = vmatpush.msra.mxu0 %v91
  %139 = vmatpush.msra.mxu0 %v87
  %140 = vmatpush.msra.mxu0 %v83
  %141 = vmatpush.msra.mxu0 %v79
  %142 = vmatpush.msra.mxu0 %v75
  %143 = vmatpush.msra.mxu0 %v71
  %144 = vmatpush.msra.mxu0 %v67
  %145 = vmatpush.msra.mxu0 %v63
  %146 = vmatpush.msra.mxu0 %v59
  %147 = vmatpush.msra.mxu0 %v55
  %148 = vmatpush.msra.mxu0 %v51
  %149 = vmatpush.msra.mxu0 %v47
  %150 = vmatpush.msra.mxu0 %v43
  %151 = vmatpush.msra.mxu0 %v39
  %152 = vmatpush.msra.mxu0 %v35
  %153 = vmatmul.f32.gmra.mxu0 %v32
  %v154 = vpop.f32.mrf.mxu0
  %v155 = vadd.f32 0.0, %v154
  %156 = vdwg.mxu0
  %157 = vmatpush.msra.mxu0 %v96
  %158 = vmatpush.msra.mxu0 %v92
  %159 = vmatpush.msra.mxu0 %v88
  %160 = vmatpush.msra.mxu0 %v84
  %161 = vmatpush.msra.mxu0 %v80
  %162 = vmatpush.msra.mxu0 %v76
  %163 = vmatpush.msra.mxu0 %v72
  %164 = vmatpush.msra.mxu0 %v68
  %165 = vmatpush.msra.mxu0 %v64
  %166 = vmatpush.msra.mxu0 %v60
  %167 = vmatpush.msra.mxu0 %v56
  %168 = vmatpush.msra.mxu0 %v52
  %169 = vmatpush.msra.mxu0 %v48
  %170 = vmatpush.msra.mxu0 %v44
  %171 = vmatpush.msra.mxu0 %v40
  %172 = vmatpush.msra.mxu0 %v36
  %173 = vmatmul.f32.gmra.mxu0 %v32
  %v174 = vpop.f32.mrf.mxu0
  %v175 = vadd.f32 0.0, %v174
  %176 = vdwg.mxu0
  %v177 = vadd.f32 %v28, %v115
  %v178 = vadd.f32 %v29, %v135
  %v179 = vadd.f32 %v30, %v155
  %v180 = vadd.f32 %v31, %v175
  %v181 = vxor.u32 %v177, 2147483648
  %v182 = vxor.u32 %v178, 2147483648
  %v183 = vxor.u32 %v179, 2147483648
  %v184 = vmul.f32 %v181, 1.442695
  %v185 = vpow.pop %v184
  %v186 = vmul.f32 %v182, 1.442695
  %v187 = vpow.pop %v186
  %v188 = vmul.f32 %v183, 1.442695
  %v189 = vpow.pop %v188
  %v190 = vadd.f32 %v185, 1.0
  %v191 = vadd.f32 %v187, 1.0
  %v192 = vadd.f32 %v189, 1.0
  %v193 = vrcp.pop %v190
  %v194 = vmul.f32 %v190, %v193
  %v195 = vsub.f32 1.0, %v194
  %v196 = vmul.f32 %v193, %v195
  %v197 = vadd.f32 %v193, %v196
  %vm198 = vweird.f32 %v190
  %vm199 = vweird.f32 %v193
  %vm200 = vmor %vm198, %vm199
  %v201 = vsel %vm200, %v193, %v197
  %v202 = vand.u32 2147483647, %v190
  %vm203 = vcmp.eq.f32.partialorder %v202, 8.507059e+37
  %v204 = vand.u32 %v190, 2147483648
  %v205 = vor.u32 1.1754944e-38, %v204
  %v206 = vsel %vm203, %v205, %v201
  %v207 = vmul.f32 1.0, %v206
  %v208 = vrcp.pop %v191
  %v209 = vmul.f32 %v191, %v208
  %v210 = vsub.f32 1.0, %v209
  %v211 = vmul.f32 %v208, %v210
  %v212 = vadd.f32 %v208, %v211
  %vm213 = vweird.f32 %v191
  %vm214 = vweird.f32 %v208
  %vm215 = vmor %vm213, %vm214
  %v216 = vsel %vm215, %v208, %v212
  %v217 = vand.u32 2147483647, %v191
  %vm218 = vcmp.eq.f32.partialorder %v217, 8.507059e+37
  %v219 = vand.u32 %v191, 2147483648
  %v220 = vor.u32 1.1754944e-38, %v219
  %v221 = vsel %vm218, %v220, %v216
  %v222 = vmul.f32 1.0, %v221
  %v223 = vrcp.pop %v192
  %v224 = vmul.f32 %v192, %v223
  %v225 = vsub.f32 1.0, %v224
  %v226 = vmul.f32 %v223, %v225
  %v227 = vadd.f32 %v223, %v226
  %vm228 = vweird.f32 %v192
  %vm229 = vweird.f32 %v223
  %vm230 = vmor %vm228, %vm229
  %v231 = vsel %vm230, %v223, %v227
  %v232 = vand.u32 2147483647, %v192
  %vm233 = vcmp.eq.f32.partialorder %v232, 8.507059e+37
  %v234 = vand.u32 %v192, 2147483648
  %v235 = vor.u32 1.1754944e-38, %v234
  %v236 = vsel %vm233, %v235, %v231
  %v237 = vmul.f32 1.0, %v236
  %v238 = vtanh.pop %v180
  %v239 = vld [vmem:[%s6] sm:$0xff]
  %v240 = vmul.f32 %v222, %v239
  %v241 = vmul.f32 %v207, %v238
  %v242 = vadd.f32 %v240, %v241
  %v243 = vtanh.pop %v242
  %v244 = vmul.f32 %v237, %v243
  %245 = vst [vmem:[%s6] sm:$0xff] %v242
  %246 = vst [vmem:[%s5] sm:$0xff] %v244
  %247 = vst [vmem:[%s4] sm:$0xff] %v244
  %s248 = scalar_lea.vmem %s0, 32
  %v249 = vld [vmem:[%s248] sm:$0xff]
  %v250 = vld [vmem:[%s248 + $0x8] sm:$0xff]
  %v251 = vld [vmem:[%s248 + $0x10] sm:$0xff]
  %v252 = vld [vmem:[%s248 + $0x18] sm:$0xff]
  %v253 = vld [vmem:[%s5] sm:$0xff]
  %v254 = vld [vmem:[%s1] sm:$0xff]
  %v255 = vld [vmem:[%s1 + $0x8] sm:$0xff]
  %v256 = vld [vmem:[%s1 + $0x10] sm:$0xff]
  %v257 = vld [vmem:[%s1 + $0x18] sm:$0xff]
  %v258 = vld [vmem:[%s1 + $0x20] sm:$0xff]
  %v259 = vld [vmem:[%s1 + $0x28] sm:$0xff]
  %v260 = vld [vmem:[%s1 + $0x30] sm:$0xff]
  %v261 = vld [vmem:[%s1 + $0x38] sm:$0xff]
  %v262 = vld [vmem:[%s1 + $0x40] sm:$0xff]
  %v263 = vld [vmem:[%s1 + $0x48] sm:$0xff]
  %v264 = vld [vmem:[%s1 + $0x50] sm:$0xff]
  %v265 = vld [vmem:[%s1 + $0x58] sm:$0xff]
  %v266 = vld [vmem:[%s1 + $0x60] sm:$0xff]
  %v267 = vld [vmem:[%s1 + $0x68] sm:$0xff]
  %v268 = vld [vmem:[%s1 + $0x70] sm:$0xff]
  %v269 = vld [vmem:[%s1 + $0x78] sm:$0xff]
  %v270 = vld [vmem:[%s1 + $0x80] sm:$0xff]
  %v271 = vld [vmem:[%s1 + $0x88] sm:$0xff]
  %v272 = vld [vmem:[%s1 + $0x90] sm:$0xff]
  %v273 = vld [vmem:[%s1 + $0x98] sm:$0xff]
  %v274 = vld [vmem:[%s1 + $0xa0] sm:$0xff]
  %v275 = vld [vmem:[%s1 + $0xa8] sm:$0xff]
  %v276 = vld [vmem:[%s1 + $0xb0] sm:$0xff]
  %v277 = vld [vmem:[%s1 + $0xb8] sm:$0xff]
  %v278 = vld [vmem:[%s1 + $0xc0] sm:$0xff]
  %v279 = vld [vmem:[%s1 + $0xc8] sm:$0xff]
  %v280 = vld [vmem:[%s1 + $0xd0] sm:$0xff]
  %v281 = vld [vmem:[%s1 + $0xd8] sm:$0xff]
  %v282 = vld [vmem:[%s1 + $0xe0] sm:$0xff]
  %v283 = vld [vmem:[%s1 + $0xe8] sm:$0xff]
  %v284 = vld [vmem:[%s1 + $0xf0] sm:$0xff]
  %v285 = vld [vmem:[%s1 + $0xf8] sm:$0xff]
  %v286 = vld [vmem:[%s1 + $0x100] sm:$0xff]
  %v287 = vld [vmem:[%s1 + $0x108] sm:$0xff]
  %v288 = vld [vmem:[%s1 + $0x110] sm:$0xff]
  %v289 = vld [vmem:[%s1 + $0x118] sm:$0xff]
  %v290 = vld [vmem:[%s1 + $0x120] sm:$0xff]
  %v291 = vld [vmem:[%s1 + $0x128] sm:$0xff]
  %v292 = vld [vmem:[%s1 + $0x130] sm:$0xff]
  %v293 = vld [vmem:[%s1 + $0x138] sm:$0xff]
  %v294 = vld [vmem:[%s1 + $0x140] sm:$0xff]
  %v295 = vld [vmem:[%s1 + $0x148] sm:$0xff]
  %v296 = vld [vmem:[%s1 + $0x150] sm:$0xff]
  %v297 = vld [vmem:[%s1 + $0x158] sm:$0xff]
  %v298 = vld [vmem:[%s1 + $0x160] sm:$0xff]
  %v299 = vld [vmem:[%s1 + $0x168] sm:$0xff]
  %v300 = vld [vmem:[%s1 + $0x170] sm:$0xff]
  %v301 = vld [vmem:[%s1 + $0x178] sm:$0xff]
  %v302 = vld [vmem:[%s1 + $0x180] sm:$0xff]
  %v303 = vld [vmem:[%s1 + $0x188] sm:$0xff]
  %v304 = vld [vmem:[%s1 + $0x190] sm:$0xff]
  %v305 = vld [vmem:[%s1 + $0x198] sm:$0xff]
  %v306 = vld [vmem:[%s1 + $0x1a0] sm:$0xff]
  %v307 = vld [vmem:[%s1 + $0x1a8] sm:$0xff]
  %v308 = vld [vmem:[%s1 + $0x1b0] sm:$0xff]
  %v309 = vld [vmem:[%s1 + $0x1b8] sm:$0xff]
  %v310 = vld [vmem:[%s1 + $0x1c0] sm:$0xff]
  %v311 = vld [vmem:[%s1 + $0x1c8] sm:$0xff]
  %v312 = vld [vmem:[%s1 + $0x1d0] sm:$0xff]
  %v313 = vld [vmem:[%s1 + $0x1d8] sm:$0xff]
  %v314 = vld [vmem:[%s1 + $0x1e0] sm:$0xff]
  %v315 = vld [vmem:[%s1 + $0x1e8] sm:$0xff]
  %v316 = vld [vmem:[%s1 + $0x1f0] sm:$0xff]
  %v317 = vld [vmem:[%s1 + $0x1f8] sm:$0xff]
  %318 = vmatpush.msra.mxu0 %v314
  %319 = vmatpush.msra.mxu0 %v310
  %320 = vmatpush.msra.mxu0 %v306
  %321 = vmatpush.msra.mxu0 %v302
  %322 = vmatpush.msra.mxu0 %v298
  %323 = vmatpush.msra.mxu0 %v294
  %324 = vmatpush.msra.mxu0 %v290
  %325 = vmatpush.msra.mxu0 %v286
  %326 = vmatpush.msra.mxu0 %v282
  %327 = vmatpush.msra.mxu0 %v278
  %328 = vmatpush.msra.mxu0 %v274
  %329 = vmatpush.msra.mxu0 %v270
  %330 = vmatpush.msra.mxu0 %v266
  %331 = vmatpush.msra.mxu0 %v262
  %332 = vmatpush.msra.mxu0 %v258
  %333 = vmatpush.msra.mxu0 %v254
  %334 = vmatmul.f32.gmra.mxu0 %v253
  %v335 = vpop.f32.mrf.mxu0
  %v336 = vadd.f32 0.0, %v335
  %337 = vdwg.mxu0
  %338 = vmatpush.msra.mxu0 %v315
  %339 = vmatpush.msra.mxu0 %v311
  %340 = vmatpush.msra.mxu0 %v307
  %341 = vmatpush.msra.mxu0 %v303
  %342 = vmatpush.msra.mxu0 %v299
  %343 = vmatpush.msra.mxu0 %v295
  %344 = vmatpush.msra.mxu0 %v291
  %345 = vmatpush.msra.mxu0 %v287
  %346 = vmatpush.msra.mxu0 %v283
  %347 = vmatpush.msra.mxu0 %v279
  %348 = vmatpush.msra.mxu0 %v275
  %349 = vmatpush.msra.mxu0 %v271
  %350 = vmatpush.msra.mxu0 %v267
  %351 = vmatpush.msra.mxu0 %v263
  %352 = vmatpush.msra.mxu0 %v259
  %353 = vmatpush.msra.mxu0 %v255
  %354 = vmatmul.f32.gmra.mxu0 %v253
  %v355 = vpop.f32.mrf.mxu0
  %v356 = vadd.f32 0.0, %v355
  %357 = vdwg.mxu0
  %358 = vmatpush.msra.mxu0 %v316
  %359 = vmatpush.msra.mxu0 %v312
  %360 = vmatpush.msra.mxu0 %v308
  %361 = vmatpush.msra.mxu0 %v304
  %362 = vmatpush.msra.mxu0 %v300
  %363 = vmatpush.msra.mxu0 %v296
  %364 = vmatpush.msra.mxu0 %v292
  %365 = vmatpush.msra.mxu0 %v288
  %366 = vmatpush.msra.mxu0 %v284
  %367 = vmatpush.msra.mxu0 %v280
  %368 = vmatpush.msra.mxu0 %v276
  %369 = vmatpush.msra.mxu0 %v272
  %370 = vmatpush.msra.mxu0 %v268
  %371 = vmatpush.msra.mxu0 %v264
  %372 = vmatpush.msra.mxu0 %v260
  %373 = vmatpush.msra.mxu0 %v256
  %374 = vmatmul.f32.gmra.mxu0 %v253
  %v375 = vpop.f32.mrf.mxu0
  %v376 = vadd.f32 0.0, %v375
  %377 = vdwg.mxu0
  %378 = vmatpush.msra.mxu0 %v317
  %379 = vmatpush.msra.mxu0 %v313
  %380 = vmatpush.msra.mxu0 %v309
  %381 = vmatpush.msra.mxu0 %v305
  %382 = vmatpush.msra.mxu0 %v301
  %383 = vmatpush.msra.mxu0 %v297
  %384 = vmatpush.msra.mxu0 %v293
  %385 = vmatpush.msra.mxu0 %v289
  %386 = vmatpush.msra.mxu0 %v285
  %387 = vmatpush.msra.mxu0 %v281
  %388 = vmatpush.msra.mxu0 %v277
  %389 = vmatpush.msra.mxu0 %v273
  %390 = vmatpush.msra.mxu0 %v269
  %391 = vmatpush.msra.mxu0 %v265
  %392 = vmatpush.msra.mxu0 %v261
  %393 = vmatpush.msra.mxu0 %v257
  %394 = vmatmul.f32.gmra.mxu0 %v253
  %v395 = vpop.f32.mrf.mxu0
  %v396 = vadd.f32 0.0, %v395
  %397 = vdwg.mxu0
  %v398 = vadd.f32 %v249, %v336
  %v399 = vadd.f32 %v250, %v356
  %v400 = vadd.f32 %v251, %v376
  %v401 = vadd.f32 %v252, %v396
  %v402 = vxor.u32 %v398, 2147483648
  %v403 = vxor.u32 %v399, 2147483648
  %v404 = vxor.u32 %v400, 2147483648
  %v405 = vmul.f32 %v402, 1.442695
  %v406 = vpow.pop %v405
  %v407 = vmul.f32 %v403, 1.442695
  %v408 = vpow.pop %v407
  %v409 = vmul.f32 %v404, 1.442695
  %v410 = vpow.pop %v409
  %v411 = vadd.f32 %v406, 1.0
  %v412 = vadd.f32 %v408, 1.0
  %v413 = vadd.f32 %v410, 1.0
  %v414 = vrcp.pop %v411
  %v415 = vmul.f32 %v411, %v414
  %v416 = vsub.f32 1.0, %v415
  %v417 = vmul.f32 %v414, %v416
  %v418 = vadd.f32 %v414, %v417
  %vm419 = vweird.f32 %v411
  %vm420 = vweird.f32 %v414
  %vm421 = vmor %vm419, %vm420
  %v422 = vsel %vm421, %v414, %v418
  %v423 = vand.u32 2147483647, %v411
  %vm424 = vcmp.eq.f32.partialorder %v423, 8.507059e+37
  %v425 = vand.u32 %v411, 2147483648
  %v426 = vor.u32 1.1754944e-38, %v425
  %v427 = vsel %vm424, %v426, %v422
  %v428 = vmul.f32 1.0, %v427
  %v429 = vrcp.pop %v412
  %v430 = vmul.f32 %v412, %v429
  %v431 = vsub.f32 1.0, %v430
  %v432 = vmul.f32 %v429, %v431
  %v433 = vadd.f32 %v429, %v432
  %vm434 = vweird.f32 %v412
  %vm435 = vweird.f32 %v429
  %vm436 = vmor %vm434, %vm435
  %v437 = vsel %vm436, %v429, %v433
  %v438 = vand.u32 2147483647, %v412
  %vm439 = vcmp.eq.f32.partialorder %v438, 8.507059e+37
  %v440 = vand.u32 %v412, 2147483648
  %v441 = vor.u32 1.1754944e-38, %v440
  %v442 = vsel %vm439, %v441, %v437
  %v443 = vmul.f32 1.0, %v442
  %v444 = vrcp.pop %v413
  %v445 = vmul.f32 %v413, %v444
  %v446 = vsub.f32 1.0, %v445
  %v447 = vmul.f32 %v444, %v446
  %v448 = vadd.f32 %v444, %v447
  %vm449 = vweird.f32 %v413
  %vm450 = vweird.f32 %v444
  %vm451 = vmor %vm449, %vm450
  %v452 = vsel %vm451, %v444, %v448
  %v453 = vand.u32 2147483647, %v413
  %vm454 = vcmp.eq.f32.partialorder %v453, 8.507059e+37
  %v455 = vand.u32 %v413, 2147483648
  %v456 = vor.u32 1.1754944e-38, %v455
  %v457 = vsel %vm454, %v456, %v452
  %v458 = vmul.f32 1.0, %v457
  %v459 = vtanh.pop %v401
  %v460 = vld [vmem:[%s6] sm:$0xff]
  %v461 = vmul.f32 %v443, %v460
  %v462 = vmul.f32 %v428, %v459
  %v463 = vadd.f32 %v461, %v462
  %v464 = vtanh.pop %v463
  %v465 = vmul.f32 %v458, %v464
  %466 = vst [vmem:[%s6] sm:$0xff] %v463
  %467 = vst [vmem:[%s5] sm:$0xff] %v465
  %s468 = scalar_lea.vmem %s4, 8
  %469 = vst [vmem:[%s468] sm:$0xff] %v465
  %s470 = scalar_lea.vmem %s0, 64
  %v471 = vld [vmem:[%s470] sm:$0xff]
  %v472 = vld [vmem:[%s470 + $0x8] sm:$0xff]
  %v473 = vld [vmem:[%s470 + $0x10] sm:$0xff]
  %v474 = vld [vmem:[%s470 + $0x18] sm:$0xff]
  %v475 = vld [vmem:[%s5] sm:$0xff]
  %v476 = vld [vmem:[%s1] sm:$0xff]
  %v477 = vld [vmem:[%s1 + $0x8] sm:$0xff]
  %v478 = vld [vmem:[%s1 + $0x10] sm:$0xff]
  %v479 = vld [vmem:[%s1 + $0x18] sm:$0xff]
  %v480 = vld [vmem:[%s1 + $0x20] sm:$0xff]
  %v481 = vld [vmem:[%s1 + $0x28] sm:$0xff]
  %v482 = vld [vmem:[%s1 + $0x30] sm:$0xff]
  %v483 = vld [vmem:[%s1 + $0x38] sm:$0xff]
  %v484 = vld [vmem:[%s1 + $0x40] sm:$0xff]
  %v485 = vld [vmem:[%s1 + $0x48] sm:$0xff]
  %v486 = vld [vmem:[%s1 + $0x50] sm:$0xff]
  %v487 = vld [vmem:[%s1 + $0x58] sm:$0xff]
  %v488 = vld [vmem:[%s1 + $0x60] sm:$0xff]
  %v489 = vld [vmem:[%s1 + $0x68] sm:$0xff]
  %v490 = vld [vmem:[%s1 + $0x70] sm:$0xff]
  %v491 = vld [vmem:[%s1 + $0x78] sm:$0xff]
  %v492 = vld [vmem:[%s1 + $0x80] sm:$0xff]
  %v493 = vld [vmem:[%s1 + $0x88] sm:$0xff]
  %v494 = vld [vmem:[%s1 + $0x90] sm:$0xff]
  %v495 = vld [vmem:[%s1 + $0x98] sm:$0xff]
  %v496 = vld [vmem:[%s1 + $0xa0] sm:$0xff]
  %v497 = vld [vmem:[%s1 + $0xa8] sm:$0xff]
  %v498 = vld [vmem:[%s1 + $0xb0] sm:$0xff]
  %v499 = vld [vmem:[%s1 + $0xb8] sm:$0xff]
  %v500 = vld [vmem:[%s1 + $0xc0] sm:$0xff]
  %v501 = vld [vmem:[%s1 + $0xc8] sm:$0xff]
  %v502 = vld [vmem:[%s1 + $0xd0] sm:$0xff]
  %v503 = vld [vmem:[%s1 + $0xd8] sm:$0xff]
  %v504 = vld [vmem:[%s1 + $0xe0] sm:$0xff]
  %v505 = vld [vmem:[%s1 + $0xe8] sm:$0xff]
  %v506 = vld [vmem:[%s1 + $0xf0] sm:$0xff]
  %v507 = vld [vmem:[%s1 + $0xf8] sm:$0xff]
  %v508 = vld [vmem:[%s1 + $0x100] sm:$0xff]
  %v509 = vld [vmem:[%s1 + $0x108] sm:$0xff]
  %v510 = vld [vmem:[%s1 + $0x110] sm:$0xff]
  %v511 = vld [vmem:[%s1 + $0x118] sm:$0xff]
  %v512 = vld [vmem:[%s1 + $0x120] sm:$0xff]
  %v513 = vld [vmem:[%s1 + $0x128] sm:$0xff]
  %v514 = vld [vmem:[%s1 + $0x130] sm:$0xff]
  %v515 = vld [vmem:[%s1 + $0x138] sm:$0xff]
  %v516 = vld [vmem:[%s1 + $0x140] sm:$0xff]
  %v517 = vld [vmem:[%s1 + $0x148] sm:$0xff]
  %v518 = vld [vmem:[%s1 + $0x150] sm:$0xff]
  %v519 = vld [vmem:[%s1 + $0x158] sm:$0xff]
  %v520 = vld [vmem:[%s1 + $0x160] sm:$0xff]
  %v521 = vld [vmem:[%s1 + $0x168] sm:$0xff]
  %v522 = vld [vmem:[%s1 + $0x170] sm:$0xff]
  %v523 = vld [vmem:[%s1 + $0x178] sm:$0xff]
  %v524 = vld [vmem:[%s1 + $0x180] sm:$0xff]
  %v525 = vld [vmem:[%s1 + $0x188] sm:$0xff]
  %v526 = vld [vmem:[%s1 + $0x190] sm:$0xff]
  %v527 = vld [vmem:[%s1 + $0x198] sm:$0xff]
  %v528 = vld [vmem:[%s1 + $0x1a0] sm:$0xff]
  %v529 = vld [vmem:[%s1 + $0x1a8] sm:$0xff]
  %v530 = vld [vmem:[%s1 + $0x1b0] sm:$0xff]
  %v531 = vld [vmem:[%s1 + $0x1b8] sm:$0xff]
  %v532 = vld [vmem:[%s1 + $0x1c0] sm:$0xff]
  %v533 = vld [vmem:[%s1 + $0x1c8] sm:$0xff]
  %v534 = vld [vmem:[%s1 + $0x1d0] sm:$0xff]
  %v535 = vld [vmem:[%s1 + $0x1d8] sm:$0xff]
  %v536 = vld [vmem:[%s1 + $0x1e0] sm:$0xff]
  %v537 = vld [vmem:[%s1 + $0x1e8] sm:$0xff]
  %v538 = vld [vmem:[%s1 + $0x1f0] sm:$0xff]
  %v539 = vld [vmem:[%s1 + $0x1f8] sm:$0xff]
  %540 = vmatpush.msra.mxu0 %v536
  %541 = vmatpush.msra.mxu0 %v532
  %542 = vmatpush.msra.mxu0 %v528
  %543 = vmatpush.msra.mxu0 %v524
  %544 = vmatpush.msra.mxu0 %v520
  %545 = vmatpush.msra.mxu0 %v516
  %546 = vmatpush.msra.mxu0 %v512
  %547 = vmatpush.msra.mxu0 %v508
  %548 = vmatpush.msra.mxu0 %v504
  %549 = vmatpush.msra.mxu0 %v500
  %550 = vmatpush.msra.mxu0 %v496
  %551 = vmatpush.msra.mxu0 %v492
  %552 = vmatpush.msra.mxu0 %v488
  %553 = vmatpush.msra.mxu0 %v484
  %554 = vmatpush.msra.mxu0 %v480
  %555 = vmatpush.msra.mxu0 %v476
  %556 = vmatmul.f32.gmra.mxu0 %v475
  %v557 = vpop.f32.mrf.mxu0
  %v558 = vadd.f32 0.0, %v557
  %559 = vdwg.mxu0
  %560 = vmatpush.msra.mxu0 %v537
  %561 = vmatpush.msra.mxu0 %v533
  %562 = vmatpush.msra.mxu0 %v529
  %563 = vmatpush.msra.mxu0 %v525
  %564 = vmatpush.msra.mxu0 %v521
  %565 = vmatpush.msra.mxu0 %v517
  %566 = vmatpush.msra.mxu0 %v513
  %567 = vmatpush.msra.mxu0 %v509
  %568 = vmatpush.msra.mxu0 %v505
  %569 = vmatpush.msra.mxu0 %v501
  %570 = vmatpush.msra.mxu0 %v497
  %571 = vmatpush.msra.mxu0 %v493
  %572 = vmatpush.msra.mxu0 %v489
  %573 = vmatpush.msra.mxu0 %v485
  %574 = vmatpush.msra.mxu0 %v481
  %575 = vmatpush.msra.mxu0 %v477
  %576 = vmatmul.f32.gmra.mxu0 %v475
  %v577 = vpop.f32.mrf.mxu0
  %v578 = vadd.f32 0.0, %v577
  %579 = vdwg.mxu0
  %580 = vmatpush.msra.mxu0 %v538
  %581 = vmatpush.msra.mxu0 %v534
  %582 = vmatpush.msra.mxu0 %v530
  %583 = vmatpush.msra.mxu0 %v526
  %584 = vmatpush.msra.mxu0 %v522
  %585 = vmatpush.msra.mxu0 %v518
  %586 = vmatpush.msra.mxu0 %v514
  %587 = vmatpush.msra.mxu0 %v510
  %588 = vmatpush.msra.mxu0 %v506
  %589 = vmatpush.msra.mxu0 %v502
  %590 = vmatpush.msra.mxu0 %v498
  %591 = vmatpush.msra.mxu0 %v494
  %592 = vmatpush.msra.mxu0 %v490
  %593 = vmatpush.msra.mxu0 %v486
  %594 = vmatpush.msra.mxu0 %v482
  %595 = vmatpush.msra.mxu0 %v478
  %596 = vmatmul.f32.gmra.mxu0 %v475
  %v597 = vpop.f32.mrf.mxu0
  %v598 = vadd.f32 0.0, %v597
  %599 = vdwg.mxu0
  %600 = vmatpush.msra.mxu0 %v539
  %601 = vmatpush.msra.mxu0 %v535
  %602 = vmatpush.msra.mxu0 %v531
  %603 = vmatpush.msra.mxu0 %v527
  %604 = vmatpush.msra.mxu0 %v523
  %605 = vmatpush.msra.mxu0 %v519
  %606 = vmatpush.msra.mxu0 %v515
  %607 = vmatpush.msra.mxu0 %v511
  %608 = vmatpush.msra.mxu0 %v507
  %609 = vmatpush.msra.mxu0 %v503
  %610 = vmatpush.msra.mxu0 %v499
  %611 = vmatpush.msra.mxu0 %v495
  %612 = vmatpush.msra.mxu0 %v491
  %613 = vmatpush.msra.mxu0 %v487
  %614 = vmatpush.msra.mxu0 %v483
  %615 = vmatpush.msra.mxu0 %v479
  %616 = vmatmul.f32.gmra.mxu0 %v475
  %v617 = vpop.f32.mrf.mxu0
  %v618 = vadd.f32 0.0, %v617
  %619 = vdwg.mxu0
  %v620 = vadd.f32 %v471, %v558
  %v621 = vadd.f32 %v472, %v578
  %v622 = vadd.f32 %v473, %v598
  %v623 = vadd.f32 %v474, %v618
  %v624 = vxor.u32 %v620, 2147483648
  %v625 = vxor.u32 %v621, 2147483648
  %v626 = vxor.u32 %v622, 2147483648
  %v627 = vmul.f32 %v624, 1.442695
  %v628 = vpow.pop %v627
  %v629 = vmul.f32 %v625, 1.442695
  %v630 = vpow.pop %v629
  %v631 = vmul.f32 %v626, 1.442695
  %v632 = vpow.pop %v631
  %v633 = vadd.f32 %v628, 1.0
  %v634 = vadd.f32 %v630, 1.0
  %v635 = vadd.f32 %v632, 1.0
  %v636 = vrcp.pop %v633
  %v637 = vmul.f32 %v633, %v636
  %v638 = vsub.f32 1.0, %v637
  %v639 = vmul.f32 %v636, %v638
  %v640 = vadd.f32 %v636, %v639
  %vm641 = vweird.f32 %v633
  %vm642 = vweird.f32 %v636
  %vm643 = vmor %vm641, %vm642
  %v644 = vsel %vm643, %v636, %v640
  %v645 = vand.u32 2147483647, %v633
  %vm646 = vcmp.eq.f32.partialorder %v645, 8.507059e+37
  %v647 = vand.u32 %v633, 2147483648
  %v648 = vor.u32 1.1754944e-38, %v647
  %v649 = vsel %vm646, %v648, %v644
  %v650 = vmul.f32 1.0, %v649
  %v651 = vrcp.pop %v634
  %v652 = vmul.f32 %v634, %v651
  %v653 = vsub.f32 1.0, %v652
  %v654 = vmul.f32 %v651, %v653
  %v655 = vadd.f32 %v651, %v654
  %vm656 = vweird.f32 %v634
  %vm657 = vweird.f32 %v651
  %vm658 = vmor %vm656, %vm657
  %v659 = vsel %vm658, %v651, %v655
  %v660 = vand.u32 2147483647, %v634
  %vm661 = vcmp.eq.f32.partialorder %v660, 8.507059e+37
  %v662 = vand.u32 %v634, 2147483648
  %v663 = vor.u32 1.1754944e-38, %v662
  %v664 = vsel %vm661, %v663, %v659
  %v665 = vmul.f32 1.0, %v664
  %v666 = vrcp.pop %v635
  %v667 = vmul.f32 %v635, %v666
  %v668 = vsub.f32 1.0, %v667
  %v669 = vmul.f32 %v666, %v668
  %v670 = vadd.f32 %v666, %v669
  %vm671 = vweird.f32 %v635
  %vm672 = vweird.f32 %v666
  %vm673 = vmor %vm671, %vm672
  %v674 = vsel %vm673, %v666, %v670
  %v675 = vand.u32 2147483647, %v635
  %vm676 = vcmp.eq.f32.partialorder %v675, 8.507059e+37
  %v677 = vand.u32 %v635, 2147483648
  %v678 = vor.u32 1.1754944e-38, %v677
  %v679 = vsel %vm676, %v678, %v674
  %v680 = vmul.f32 1.0, %v679
  %v681 = vtanh.pop %v623
  %v682 = vld [vmem:[%s6] sm:$0xff]
  %v683 = vmul.f32 %v665, %v682
  %v684 = vmul.f32 %v650, %v681
  %v685 = vadd.f32 %v683, %v684
  %v686 = vtanh.pop %v685
  %v687 = vmul.f32 %v680, %v686
  %688 = vst [vmem:[%s6] sm:$0xff] %v685
  %689 = vst [vmem:[%s5] sm:$0xff] %v687
  %s690 = scalar_lea.vmem %s4, 16
  %691 = vst [vmem:[%s690] sm:$0xff] %v687
  %s692 = scalar_lea.vmem %s0, 96
  %v693 = vld [vmem:[%s692] sm:$0xff]
  %v694 = vld [vmem:[%s692 + $0x8] sm:$0xff]
  %v695 = vld [vmem:[%s692 + $0x10] sm:$0xff]
  %v696 = vld [vmem:[%s692 + $0x18] sm:$0xff]
  %v697 = vld [vmem:[%s5] sm:$0xff]
  %v698 = vld [vmem:[%s1] sm:$0xff]
  %v699 = vld [vmem:[%s1 + $0x8] sm:$0xff]
  %v700 = vld [vmem:[%s1 + $0x10] sm:$0xff]
  %v701 = vld [vmem:[%s1 + $0x18] sm:$0xff]
  %v702 = vld [vmem:[%s1 + $0x20] sm:$0xff]
  %v703 = vld [vmem:[%s1 + $0x28] sm:$0xff]
  %v704 = vld [vmem:[%s1 + $0x30] sm:$0xff]
  %v705 = vld [vmem:[%s1 + $0x38] sm:$0xff]
  %v706 = vld [vmem:[%s1 + $0x40] sm:$0xff]
  %v707 = vld [vmem:[%s1 + $0x48] sm:$0xff]
  %v708 = vld [vmem:[%s1 + $0x50] sm:$0xff]
  %v709 = vld [vmem:[%s1 + $0x58] sm:$0xff]
  %v710 = vld [vmem:[%s1 + $0x60] sm:$0xff]
  %v711 = vld [vmem:[%s1 + $0x68] sm:$0xff]
  %v712 = vld [vmem:[%s1 + $0x70] sm:$0xff]
  %v713 = vld [vmem:[%s1 + $0x78] sm:$0xff]
  %v714 = vld [vmem:[%s1 + $0x80] sm:$0xff]
  %v715 = vld [vmem:[%s1 + $0x88] sm:$0xff]
  %v716 = vld [vmem:[%s1 + $0x90] sm:$0xff]
  %v717 = vld [vmem:[%s1 + $0x98] sm:$0xff]
  %v718 = vld [vmem:[%s1 + $0xa0] sm:$0xff]
  %v719 = vld [vmem:[%s1 + $0xa8] sm:$0xff]
  %v720 = vld [vmem:[%s1 + $0xb0] sm:$0xff]
  %v721 = vld [vmem:[%s1 + $0xb8] sm:$0xff]
  %v722 = vld [vmem:[%s1 + $0xc0] sm:$0xff]
  %v723 = vld [vmem:[%s1 + $0xc8] sm:$0xff]
  %v724 = vld [vmem:[%s1 + $0xd0] sm:$0xff]
  %v725 = vld [vmem:[%s1 + $0xd8] sm:$0xff]
  %v726 = vld [vmem:[%s1 + $0xe0] sm:$0xff]
  %v727 = vld [vmem:[%s1 + $0xe8] sm:$0xff]
  %v728 = vld [vmem:[%s1 + $0xf0] sm:$0xff]
  %v729 = vld [vmem:[%s1 + $0xf8] sm:$0xff]
  %v730 = vld [vmem:[%s1 + $0x100] sm:$0xff]
  %v731 = vld [vmem:[%s1 + $0x108] sm:$0xff]
  %v732 = vld [vmem:[%s1 + $0x110] sm:$0xff]
  %v733 = vld [vmem:[%s1 + $0x118] sm:$0xff]
  %v734 = vld [vmem:[%s1 + $0x120] sm:$0xff]
  %v735 = vld [vmem:[%s1 + $0x128] sm:$0xff]
  %v736 = vld [vmem:[%s1 + $0x130] sm:$0xff]
  %v737 = vld [vmem:[%s1 + $0x138] sm:$0xff]
  %v738 = vld [vmem:[%s1 + $0x140] sm:$0xff]
  %v739 = vld [vmem:[%s1 + $0x148] sm:$0xff]
  %v740 = vld [vmem:[%s1 + $0x150] sm:$0xff]
  %v741 = vld [vmem:[%s1 + $0x158] sm:$0xff]
  %v742 = vld [vmem:[%s1 + $0x160] sm:$0xff]
  %v743 = vld [vmem:[%s1 + $0x168] sm:$0xff]
  %v744 = vld [vmem:[%s1 + $0x170] sm:$0xff]
  %v745 = vld [vmem:[%s1 + $0x178] sm:$0xff]
  %v746 = vld [vmem:[%s1 + $0x180] sm:$0xff]
  %v747 = vld [vmem:[%s1 + $0x188] sm:$0xff]
  %v748 = vld [vmem:[%s1 + $0x190] sm:$0xff]
  %v749 = vld [vmem:[%s1 + $0x198] sm:$0xff]
  %v750 = vld [vmem:[%s1 + $0x1a0] sm:$0xff]
  %v751 = vld [vmem:[%s1 + $0x1a8] sm:$0xff]
  %v752 = vld [vmem:[%s1 + $0x1b0] sm:$0xff]
  %v753 = vld [vmem:[%s1 + $0x1b8] sm:$0xff]
  %v754 = vld [vmem:[%s1 + $0x1c0] sm:$0xff]
  %v755 = vld [vmem:[%s1 + $0x1c8] sm:$0xff]
  %v756 = vld [vmem:[%s1 + $0x1d0] sm:$0xff]
  %v757 = vld [vmem:[%s1 + $0x1d8] sm:$0xff]
  %v758 = vld [vmem:[%s1 + $0x1e0] sm:$0xff]
  %v759 = vld [vmem:[%s1 + $0x1e8] sm:$0xff]
  %v760 = vld [vmem:[%s1 + $0x1f0] sm:$0xff]
  %v761 = vld [vmem:[%s1 + $0x1f8] sm:$0xff]
  %762 = vmatpush.msra.mxu0 %v758
  %763 = vmatpush.msra.mxu0 %v754
  %764 = vmatpush.msra.mxu0 %v750
  %765 = vmatpush.msra.mxu0 %v746
  %766 = vmatpush.msra.mxu0 %v742
  %767 = vmatpush.msra.mxu0 %v738
  %768 = vmatpush.msra.mxu0 %v734
  %769 = vmatpush.msra.mxu0 %v730
  %770 = vmatpush.msra.mxu0 %v726
  %771 = vmatpush.msra.mxu0 %v722
  %772 = vmatpush.msra.mxu0 %v718
  %773 = vmatpush.msra.mxu0 %v714
  %774 = vmatpush.msra.mxu0 %v710
  %775 = vmatpush.msra.mxu0 %v706
  %776 = vmatpush.msra.mxu0 %v702
  %777 = vmatpush.msra.mxu0 %v698
  %778 = vmatmul.f32.gmra.mxu0 %v697
  %v779 = vpop.f32.mrf.mxu0
  %v780 = vadd.f32 0.0, %v779
  %781 = vdwg.mxu0
  %782 = vmatpush.msra.mxu0 %v759
  %783 = vmatpush.msra.mxu0 %v755
  %784 = vmatpush.msra.mxu0 %v751
  %785 = vmatpush.msra.mxu0 %v747
  %786 = vmatpush.msra.mxu0 %v743
  %787 = vmatpush.msra.mxu0 %v739
  %788 = vmatpush.msra.mxu0 %v735
  %789 = vmatpush.msra.mxu0 %v731
  %790 = vmatpush.msra.mxu0 %v727
  %791 = vmatpush.msra.mxu0 %v723
  %792 = vmatpush.msra.mxu0 %v719
  %793 = vmatpush.msra.mxu0 %v715
  %794 = vmatpush.msra.mxu0 %v711
  %795 = vmatpush.msra.mxu0 %v707
  %796 = vmatpush.msra.mxu0 %v703
  %797 = vmatpush.msra.mxu0 %v699
  %798 = vmatmul.f32.gmra.mxu0 %v697
  %v799 = vpop.f32.mrf.mxu0
  %v800 = vadd.f32 0.0, %v799
  %801 = vdwg.mxu0
  %802 = vmatpush.msra.mxu0 %v760
  %803 = vmatpush.msra.mxu0 %v756
  %804 = vmatpush.msra.mxu0 %v752
  %805 = vmatpush.msra.mxu0 %v748
  %806 = vmatpush.msra.mxu0 %v744
  %807 = vmatpush.msra.mxu0 %v740
  %808 = vmatpush.msra.mxu0 %v736
  %809 = vmatpush.msra.mxu0 %v732
  %810 = vmatpush.msra.mxu0 %v728
  %811 = vmatpush.msra.mxu0 %v724
  %812 = vmatpush.msra.mxu0 %v720
  %813 = vmatpush.msra.mxu0 %v716
  %814 = vmatpush.msra.mxu0 %v712
  %815 = vmatpush.msra.mxu0 %v708
  %816 = vmatpush.msra.mxu0 %v704
  %817 = vmatpush.msra.mxu0 %v700
  %818 = vmatmul.f32.gmra.mxu0 %v697
  %v819 = vpop.f32.mrf.mxu0
  %v820 = vadd.f32 0.0, %v819
  %821 = vdwg.mxu0
  %822 = vmatpush.msra.mxu0 %v761
  %823 = vmatpush.msra.mxu0 %v757
  %824 = vmatpush.msra.mxu0 %v753
  %825 = vmatpush.msra.mxu0 %v749
  %826 = vmatpush.msra.mxu0 %v745
  %827 = vmatpush.msra.mxu0 %v741
  %828 = vmatpush.msra.mxu0 %v737
  %829 = vmatpush.msra.mxu0 %v733
  %830 = vmatpush.msra.mxu0 %v729
  %831 = vmatpush.msra.mxu0 %v725
  %832 = vmatpush.msra.mxu0 %v721
  %833 = vmatpush.msra.mxu0 %v717
  %834 = vmatpush.msra.mxu0 %v713
  %835 = vmatpush.msra.mxu0 %v709
  %836 = vmatpush.msra.mxu0 %v705
  %837 = vmatpush.msra.mxu0 %v701
  %838 = vmatmul.f32.gmra.mxu0 %v697
  %v839 = vpop.f32.mrf.mxu0
  %v840 = vadd.f32 0.0, %v839
  %841 = vdwg.mxu0
  %v842 = vadd.f32 %v693, %v780
  %v843 = vadd.f32 %v694, %v800
  %v844 = vadd.f32 %v695, %v820
  %v845 = vadd.f32 %v696, %v840
  %v846 = vxor.u32 %v842, 2147483648
  %v847 = vxor.u32 %v843, 2147483648
  %v848 = vxor.u32 %v844, 2147483648
  %v849 = vmul.f32 %v846, 1.442695
  %v850 = vpow.pop %v849
  %v851 = vmul.f32 %v847, 1.442695
  %v852 = vpow.pop %v851
  %v853 = vmul.f32 %v848, 1.442695
  %v854 = vpow.pop %v853
  %v855 = vadd.f32 %v850, 1.0
  %v856 = vadd.f32 %v852, 1.0
  %v857 = vadd.f32 %v854, 1.0
  %v858 = vrcp.pop %v855
  %v859 = vmul.f32 %v855, %v858
  %v860 = vsub.f32 1.0, %v859
  %v861 = vmul.f32 %v858, %v860
  %v862 = vadd.f32 %v858, %v861
  %vm863 = vweird.f32 %v855
  %vm864 = vweird.f32 %v858
  %vm865 = vmor %vm863, %vm864
  %v866 = vsel %vm865, %v858, %v862
  %v867 = vand.u32 2147483647, %v855
  %vm868 = vcmp.eq.f32.partialorder %v867, 8.507059e+37
  %v869 = vand.u32 %v855, 2147483648
  %v870 = vor.u32 1.1754944e-38, %v869
  %v871 = vsel %vm868, %v870, %v866
  %v872 = vmul.f32 1.0, %v871
  %v873 = vrcp.pop %v856
  %v874 = vmul.f32 %v856, %v873
  %v875 = vsub.f32 1.0, %v874
  %v876 = vmul.f32 %v873, %v875
  %v877 = vadd.f32 %v873, %v876
  %vm878 = vweird.f32 %v856
  %vm879 = vweird.f32 %v873
  %vm880 = vmor %vm878, %vm879
  %v881 = vsel %vm880, %v873, %v877
  %v882 = vand.u32 2147483647, %v856
  %vm883 = vcmp.eq.f32.partialorder %v882, 8.507059e+37
  %v884 = vand.u32 %v856, 2147483648
  %v885 = vor.u32 1.1754944e-38, %v884
  %v886 = vsel %vm883, %v885, %v881
  %v887 = vmul.f32 1.0, %v886
  %v888 = vrcp.pop %v857
  %v889 = vmul.f32 %v857, %v888
  %v890 = vsub.f32 1.0, %v889
  %v891 = vmul.f32 %v888, %v890
  %v892 = vadd.f32 %v888, %v891
  %vm893 = vweird.f32 %v857
  %vm894 = vweird.f32 %v888
  %vm895 = vmor %vm893, %vm894
  %v896 = vsel %vm895, %v888, %v892
  %v897 = vand.u32 2147483647, %v857
  %vm898 = vcmp.eq.f32.partialorder %v897, 8.507059e+37
  %v899 = vand.u32 %v857, 2147483648
  %v900 = vor.u32 1.1754944e-38, %v899
  %v901 = vsel %vm898, %v900, %v896
  %v902 = vmul.f32 1.0, %v901
  %v903 = vtanh.pop %v845
  %v904 = vld [vmem:[%s6] sm:$0xff]
  %v905 = vmul.f32 %v887, %v904
  %v906 = vmul.f32 %v872, %v903
  %v907 = vadd.f32 %v905, %v906
  %v908 = vtanh.pop %v907
  %v909 = vmul.f32 %v902, %v908
  %910 = vst [vmem:[%s6] sm:$0xff] %v907
  %911 = vst [vmem:[%s5] sm:$0xff] %v909
  %s912 = scalar_lea.vmem %s4, 24
  %913 = vst [vmem:[%s912] sm:$0xff] %v909
  %s914 = scalar_lea.vmem %s0, 128
  %v915 = vld [vmem:[%s914] sm:$0xff]
  %v916 = vld [vmem:[%s914 + $0x8] sm:$0xff]
  %v917 = vld [vmem:[%s914 + $0x10] sm:$0xff]
  %v918 = vld [vmem:[%s914 + $0x18] sm:$0xff]
  %v919 = vld [vmem:[%s5] sm:$0xff]
  %v920 = vld [vmem:[%s1] sm:$0xff]
  %v921 = vld [vmem:[%s1 + $0x8] sm:$0xff]
  %v922 = vld [vmem:[%s1 + $0x10] sm:$0xff]
  %v923 = vld [vmem:[%s1 + $0x18] sm:$0xff]
  %v924 = vld [vmem:[%s1 + $0x20] sm:$0xff]
  %v925 = vld [vmem:[%s1 + $0x28] sm:$0xff]
  %v926 = vld [vmem:[%s1 + $0x30] sm:$0xff]
  %v927 = vld [vmem:[%s1 + $0x38] sm:$0xff]
  %v928 = vld [vmem:[%s1 + $0x40] sm:$0xff]
  %v929 = vld [vmem:[%s1 + $0x48] sm:$0xff]
  %v930 = vld [vmem:[%s1 + $0x50] sm:$0xff]
  %v931 = vld [vmem:[%s1 + $0x58] sm:$0xff]
  %v932 = vld [vmem:[%s1 + $0x60] sm:$0xff]
  %v933 = vld [vmem:[%s1 + $0x68] sm:$0xff]
  %v934 = vld [vmem:[%s1 + $0x70] sm:$0xff]
  %v935 = vld [vmem:[%s1 + $0x78] sm:$0xff]
  %v936 = vld [vmem:[%s1 + $0x80] sm:$0xff]
  %v937 = vld [vmem:[%s1 + $0x88] sm:$0xff]
  %v938 = vld [vmem:[%s1 + $0x90] sm:$0xff]
  %v939 = vld [vmem:[%s1 + $0x98] sm:$0xff]
  %v940 = vld [vmem:[%s1 + $0xa0] sm:$0xff]
  %v941 = vld [vmem:[%s1 + $0xa8] sm:$0xff]
  %v942 = vld [vmem:[%s1 + $0xb0] sm:$0xff]
  %v943 = vld [vmem:[%s1 + $0xb8] sm:$0xff]
  %v944 = vld [vmem:[%s1 + $0xc0] sm:$0xff]
  %v945 = vld [vmem:[%s1 + $0xc8] sm:$0xff]
  %v946 = vld [vmem:[%s1 + $0xd0] sm:$0xff]
  %v947 = vld [vmem:[%s1 + $0xd8] sm:$0xff]
  %v948 = vld [vmem:[%s1 + $0xe0] sm:$0xff]
  %v949 = vld [vmem:[%s1 + $0xe8] sm:$0xff]
  %v950 = vld [vmem:[%s1 + $0xf0] sm:$0xff]
  %v951 = vld [vmem:[%s1 + $0xf8] sm:$0xff]
  %v952 = vld [vmem:[%s1 + $0x100] sm:$0xff]
  %v953 = vld [vmem:[%s1 + $0x108] sm:$0xff]
  %v954 = vld [vmem:[%s1 + $0x110] sm:$0xff]
  %v955 = vld [vmem:[%s1 + $0x118] sm:$0xff]
  %v956 = vld [vmem:[%s1 + $0x120] sm:$0xff]
  %v957 = vld [vmem:[%s1 + $0x128] sm:$0xff]
  %v958 = vld [vmem:[%s1 + $0x130] sm:$0xff]
  %v959 = vld [vmem:[%s1 + $0x138] sm:$0xff]
  %v960 = vld [vmem:[%s1 + $0x140] sm:$0xff]
  %v961 = vld [vmem:[%s1 + $0x148] sm:$0xff]
  %v962 = vld [vmem:[%s1 + $0x150] sm:$0xff]
  %v963 = vld [vmem:[%s1 + $0x158] sm:$0xff]
  %v964 = vld [vmem:[%s1 + $0x160] sm:$0xff]
  %v965 = vld [vmem:[%s1 + $0x168] sm:$0xff]
  %v966 = vld [vmem:[%s1 + $0x170] sm:$0xff]
  %v967 = vld [vmem:[%s1 + $0x178] sm:$0xff]
  %v968 = vld [vmem:[%s1 + $0x180] sm:$0xff]
  %v969 = vld [vmem:[%s1 + $0x188] sm:$0xff]
  %v970 = vld [vmem:[%s1 + $0x190] sm:$0xff]
  %v971 = vld [vmem:[%s1 + $0x198] sm:$0xff]
  %v972 = vld [vmem:[%s1 + $0x1a0] sm:$0xff]
  %v973 = vld [vmem:[%s1 + $0x1a8] sm:$0xff]
  %v974 = vld [vmem:[%s1 + $0x1b0] sm:$0xff]
  %v975 = vld [vmem:[%s1 + $0x1b8] sm:$0xff]
  %v976 = vld [vmem:[%s1 + $0x1c0] sm:$0xff]
  %v977 = vld [vmem:[%s1 + $0x1c8] sm:$0xff]
  %v978 = vld [vmem:[%s1 + $0x1d0] sm:$0xff]
  %v979 = vld [vmem:[%s1 + $0x1d8] sm:$0xff]
  %v980 = vld [vmem:[%s1 + $0x1e0] sm:$0xff]
  %v981 = vld [vmem:[%s1 + $0x1e8] sm:$0xff]
  %v982 = vld [vmem:[%s1 + $0x1f0] sm:$0xff]
  %v983 = vld [vmem:[%s1 + $0x1f8] sm:$0xff]
  %984 = vmatpush.msra.mxu0 %v980
  %985 = vmatpush.msra.mxu0 %v976
  %986 = vmatpush.msra.mxu0 %v972
  %987 = vmatpush.msra.mxu0 %v968
  %988 = vmatpush.msra.mxu0 %v964
  %989 = vmatpush.msra.mxu0 %v960
  %990 = vmatpush.msra.mxu0 %v956
  %991 = vmatpush.msra.mxu0 %v952
  %992 = vmatpush.msra.mxu0 %v948
  %993 = vmatpush.msra.mxu0 %v944
  %994 = vmatpush.msra.mxu0 %v940
  %995 = vmatpush.msra.mxu0 %v936
  %996 = vmatpush.msra.mxu0 %v932
  %997 = vmatpush.msra.mxu0 %v928
  %998 = vmatpush.msra.mxu0 %v924
  %999 = vmatpush.msra.mxu0 %v920
  %1000 = vmatmul.f32.gmra.mxu0 %v919
  %v1001 = vpop.f32.mrf.mxu0
  %v1002 = vadd.f32 0.0, %v1001
  %1003 = vdwg.mxu0
  %1004 = vmatpush.msra.mxu0 %v981
  %1005 = vmatpush.msra.mxu0 %v977
  %1006 = vmatpush.msra.mxu0 %v973
  %1007 = vmatpush.msra.mxu0 %v969
  %1008 = vmatpush.msra.mxu0 %v965
  %1009 = vmatpush.msra.mxu0 %v961
  %1010 = vmatpush.msra.mxu0 %v957
  %1011 = vmatpush.msra.mxu0 %v953
  %1012 = vmatpush.msra.mxu0 %v949
  %1013 = vmatpush.msra.mxu0 %v945
  %1014 = vmatpush.msra.mxu0 %v941
  %1015 = vmatpush.msra.mxu0 %v937
  %1016 = vmatpush.msra.mxu0 %v933
  %1017 = vmatpush.msra.mxu0 %v929
  %1018 = vmatpush.msra.mxu0 %v925
  %1019 = vmatpush.msra.mxu0 %v921
  %1020 = vmatmul.f32.gmra.mxu0 %v919
  %v1021 = vpop.f32.mrf.mxu0
  %v1022 = vadd.f32 0.0, %v1021
  %1023 = vdwg.mxu0
  %1024 = vmatpush.msra.mxu0 %v982
  %1025 = vmatpush.msra.mxu0 %v978
  %1026 = vmatpush.msra.mxu0 %v974
  %1027 = vmatpush.msra.mxu0 %v970
  %1028 = vmatpush.msra.mxu0 %v966
  %1029 = vmatpush.msra.mxu0 %v962
  %1030 = vmatpush.msra.mxu0 %v958
  %1031 = vmatpush.msra.mxu0 %v954
  %1032 = vmatpush.msra.mxu0 %v950
  %1033 = vmatpush.msra.mxu0 %v946
  %1034 = vmatpush.msra.mxu0 %v942
  %1035 = vmatpush.msra.mxu0 %v938
  %1036 = vmatpush.msra.mxu0 %v934
  %1037 = vmatpush.msra.mxu0 %v930
  %1038 = vmatpush.msra.mxu0 %v926
  %1039 = vmatpush.msra.mxu0 %v922
  %1040 = vmatmul.f32.gmra.mxu0 %v919
  %v1041 = vpop.f32.mrf.mxu0
  %v1042 = vadd.f32 0.0, %v1041
  %1043 = vdwg.mxu0
  %1044 = vmatpush.msra.mxu0 %v983
  %1045 = vmatpush.msra.mxu0 %v979
  %1046 = vmatpush.msra.mxu0 %v975
  %1047 = vmatpush.msra.mxu0 %v971
  %1048 = vmatpush.msra.mxu0 %v967
  %1049 = vmatpush.msra.mxu0 %v963
  %1050 = vmatpush.msra.mxu0 %v959
  %1051 = vmatpush.msra.mxu0 %v955
  %1052 = vmatpush.msra.mxu0 %v951
  %1053 = vmatpush.msra.mxu0 %v947
  %1054 = vmatpush.msra.mxu0 %v943
  %1055 = vmatpush.msra.mxu0 %v939
  %1056 = vmatpush.msra.mxu0 %v935
  %1057 = vmatpush.msra.mxu0 %v931
  %1058 = vmatpush.msra.mxu0 %v927
  %1059 = vmatpush.msra.mxu0 %v923
  %1060 = vmatmul.f32.gmra.mxu0 %v919
  %v1061 = vpop.f32.mrf.mxu0
  %v1062 = vadd.f32 0.0, %v1061
  %1063 = vdwg.mxu0
  %v1064 = vadd.f32 %v915, %v1002
  %v1065 = vadd.f32 %v916, %v1022
  %v1066 = vadd.f32 %v917, %v1042
  %v1067 = vadd.f32 %v918, %v1062
  %v1068 = vxor.u32 %v1064, 2147483648
  %v1069 = vxor.u32 %v1065, 2147483648
  %v1070 = vxor.u32 %v1066, 2147483648
  %v1071 = vmul.f32 %v1068, 1.442695
  %v1072 = vpow.pop %v1071
  %v1073 = vmul.f32 %v1069, 1.442695
  %v1074 = vpow.pop %v1073
  %v1075 = vmul.f32 %v1070, 1.442695
  %v1076 = vpow.pop %v1075
  %v1077 = vadd.f32 %v1072, 1.0
  %v1078 = vadd.f32 %v1074, 1.0
  %v1079 = vadd.f32 %v1076, 1.0
  %v1080 = vrcp.pop %v1077
  %v1081 = vmul.f32 %v1077, %v1080
  %v1082 = vsub.f32 1.0, %v1081
  %v1083 = vmul.f32 %v1080, %v1082
  %v1084 = vadd.f32 %v1080, %v1083
  %vm1085 = vweird.f32 %v1077
  %vm1086 = vweird.f32 %v1080
  %vm1087 = vmor %vm1085, %vm1086
  %v1088 = vsel %vm1087, %v1080, %v1084
  %v1089 = vand.u32 2147483647, %v1077
  %vm1090 = vcmp.eq.f32.partialorder %v1089, 8.507059e+37
  %v1091 = vand.u32 %v1077, 2147483648
  %v1092 = vor.u32 1.1754944e-38, %v1091
  %v1093 = vsel %vm1090, %v1092, %v1088
  %v1094 = vmul.f32 1.0, %v1093
  %v1095 = vrcp.pop %v1078
  %v1096 = vmul.f32 %v1078, %v1095
  %v1097 = vsub.f32 1.0, %v1096
  %v1098 = vmul.f32 %v1095, %v1097
  %v1099 = vadd.f32 %v1095, %v1098
  %vm1100 = vweird.f32 %v1078
  %vm1101 = vweird.f32 %v1095
  %vm1102 = vmor %vm1100, %vm1101
  %v1103 = vsel %vm1102, %v1095, %v1099
  %v1104 = vand.u32 2147483647, %v1078
  %vm1105 = vcmp.eq.f32.partialorder %v1104, 8.507059e+37
  %v1106 = vand.u32 %v1078, 2147483648
  %v1107 = vor.u32 1.1754944e-38, %v1106
  %v1108 = vsel %vm1105, %v1107, %v1103
  %v1109 = vmul.f32 1.0, %v1108
  %v1110 = vrcp.pop %v1079
  %v1111 = vmul.f32 %v1079, %v1110
  %v1112 = vsub.f32 1.0, %v1111
  %v1113 = vmul.f32 %v1110, %v1112
  %v1114 = vadd.f32 %v1110, %v1113
  %vm1115 = vweird.f32 %v1079
  %vm1116 = vweird.f32 %v1110
  %vm1117 = vmor %vm1115, %vm1116
  %v1118 = vsel %vm1117, %v1110, %v1114
  %v1119 = vand.u32 2147483647, %v1079
  %vm1120 = vcmp.eq.f32.partialorder %v1119, 8.507059e+37
  %v1121 = vand.u32 %v1079, 2147483648
  %v1122 = vor.u32 1.1754944e-38, %v1121
  %v1123 = vsel %vm1120, %v1122, %v1118
  %v1124 = vmul.f32 1.0, %v1123
  %v1125 = vtanh.pop %v1067
  %v1126 = vld [vmem:[%s6] sm:$0xff]
  %v1127 = vmul.f32 %v1109, %v1126
  %v1128 = vmul.f32 %v1094, %v1125
  %v1129 = vadd.f32 %v1127, %v1128
  %v1130 = vtanh.pop %v1129
  %v1131 = vmul.f32 %v1124, %v1130
  %1132 = vst [vmem:[%s6] sm:$0xff] %v1129
  %1133 = vst [vmem:[%s5] sm:$0xff] %v1131
  %s1134 = scalar_lea.vmem %s4, 32
  %1135 = vst [vmem:[%s1134] sm:$0xff] %v1131
  %s1136 = scalar_lea.vmem %s0, 160
  %v1137 = vld [vmem:[%s1136] sm:$0xff]
  %v1138 = vld [vmem:[%s1136 + $0x8] sm:$0xff]
  %v1139 = vld [vmem:[%s1136 + $0x10] sm:$0xff]
  %v1140 = vld [vmem:[%s1136 + $0x18] sm:$0xff]
  %v1141 = vld [vmem:[%s5] sm:$0xff]
  %v1142 = vld [vmem:[%s1] sm:$0xff]
  %v1143 = vld [vmem:[%s1 + $0x8] sm:$0xff]
  %v1144 = vld [vmem:[%s1 + $0x10] sm:$0xff]
  %v1145 = vld [vmem:[%s1 + $0x18] sm:$0xff]
  %v1146 = vld [vmem:[%s1 + $0x20] sm:$0xff]
  %v1147 = vld [vmem:[%s1 + $0x28] sm:$0xff]
  %v1148 = vld [vmem:[%s1 + $0x30] sm:$0xff]
  %v1149 = vld [vmem:[%s1 + $0x38] sm:$0xff]
  %v1150 = vld [vmem:[%s1 + $0x40] sm:$0xff]
  %v1151 = vld [vmem:[%s1 + $0x48] sm:$0xff]
  %v1152 = vld [vmem:[%s1 + $0x50] sm:$0xff]
  %v1153 = vld [vmem:[%s1 + $0x58] sm:$0xff]
  %v1154 = vld [vmem:[%s1 + $0x60] sm:$0xff]
  %v1155 = vld [vmem:[%s1 + $0x68] sm:$0xff]
  %v1156 = vld [vmem:[%s1 + $0x70] sm:$0xff]
  %v1157 = vld [vmem:[%s1 + $0x78] sm:$0xff]
  %v1158 = vld [vmem:[%s1 + $0x80] sm:$0xff]
  %v1159 = vld [vmem:[%s1 + $0x88] sm:$0xff]
  %v1160 = vld [vmem:[%s1 + $0x90] sm:$0xff]
  %v1161 = vld [vmem:[%s1 + $0x98] sm:$0xff]
  %v1162 = vld [vmem:[%s1 + $0xa0] sm:$0xff]
  %v1163 = vld [vmem:[%s1 + $0xa8] sm:$0xff]
  %v1164 = vld [vmem:[%s1 + $0xb0] sm:$0xff]
  %v1165 = vld [vmem:[%s1 + $0xb8] sm:$0xff]
  %v1166 = vld [vmem:[%s1 + $0xc0] sm:$0xff]
  %v1167 = vld [vmem:[%s1 + $0xc8] sm:$0xff]
  %v1168 = vld [vmem:[%s1 + $0xd0] sm:$0xff]
  %v1169 = vld [vmem:[%s1 + $0xd8] sm:$0xff]
  %v1170 = vld [vmem:[%s1 + $0xe0] sm:$0xff]
  %v1171 = vld [vmem:[%s1 + $0xe8] sm:$0xff]
  %v1172 = vld [vmem:[%s1 + $0xf0] sm:$0xff]
  %v1173 = vld [vmem:[%s1 + $0xf8] sm:$0xff]
  %v1174 = vld [vmem:[%s1 + $0x100] sm:$0xff]
  %v1175 = vld [vmem:[%s1 + $0x108] sm:$0xff]
  %v1176 = vld [vmem:[%s1 + $0x110] sm:$0xff]
  %v1177 = vld [vmem:[%s1 + $0x118] sm:$0xff]
  %v1178 = vld [vmem:[%s1 + $0x120] sm:$0xff]
  %v1179 = vld [vmem:[%s1 + $0x128] sm:$0xff]
  %v1180 = vld [vmem:[%s1 + $0x130] sm:$0xff]
  %v1181 = vld [vmem:[%s1 + $0x138] sm:$0xff]
  %v1182 = vld [vmem:[%s1 + $0x140] sm:$0xff]
  %v1183 = vld [vmem:[%s1 + $0x148] sm:$0xff]
  %v1184 = vld [vmem:[%s1 + $0x150] sm:$0xff]
  %v1185 = vld [vmem:[%s1 + $0x158] sm:$0xff]
  %v1186 = vld [vmem:[%s1 + $0x160] sm:$0xff]
  %v1187 = vld [vmem:[%s1 + $0x168] sm:$0xff]
  %v1188 = vld [vmem:[%s1 + $0x170] sm:$0xff]
  %v1189 = vld [vmem:[%s1 + $0x178] sm:$0xff]
  %v1190 = vld [vmem:[%s1 + $0x180] sm:$0xff]
  %v1191 = vld [vmem:[%s1 + $0x188] sm:$0xff]
  %v1192 = vld [vmem:[%s1 + $0x190] sm:$0xff]
  %v1193 = vld [vmem:[%s1 + $0x198] sm:$0xff]
  %v1194 = vld [vmem:[%s1 + $0x1a0] sm:$0xff]
  %v1195 = vld [vmem:[%s1 + $0x1a8] sm:$0xff]
  %v1196 = vld [vmem:[%s1 + $0x1b0] sm:$0xff]
  %v1197 = vld [vmem:[%s1 + $0x1b8] sm:$0xff]
  %v1198 = vld [vmem:[%s1 + $0x1c0] sm:$0xff]
  %v1199 = vld [vmem:[%s1 + $0x1c8] sm:$0xff]
  %v1200 = vld [vmem:[%s1 + $0x1d0] sm:$0xff]
  %v1201 = vld [vmem:[%s1 + $0x1d8] sm:$0xff]
  %v1202 = vld [vmem:[%s1 + $0x1e0] sm:$0xff]
  %v1203 = vld [vmem:[%s1 + $0x1e8] sm:$0xff]
  %v1204 = vld [vmem:[%s1 + $0x1f0] sm:$0xff]
  %v1205 = vld [vmem:[%s1 + $0x1f8] sm:$0xff]
  %1206 = vmatpush.msra.mxu0 %v1202
  %1207 = vmatpush.msra.mxu0 %v1198
  %1208 = vmatpush.msra.mxu0 %v1194
  %1209 = vmatpush.msra.mxu0 %v1190
  %1210 = vmatpush.msra.mxu0 %v1186
  %1211 = vmatpush.msra.mxu0 %v1182
  %1212 = vmatpush.msra.mxu0 %v1178
  %1213 = vmatpush.msra.mxu0 %v1174
  %1214 = vmatpush.msra.mxu0 %v1170
  %1215 = vmatpush.msra.mxu0 %v1166
  %1216 = vmatpush.msra.mxu0 %v1162
  %1217 = vmatpush.msra.mxu0 %v1158
  %1218 = vmatpush.msra.mxu0 %v1154
  %1219 = vmatpush.msra.mxu0 %v1150
  %1220 = vmatpush.msra.mxu0 %v1146
  %1221 = vmatpush.msra.mxu0 %v1142
  %1222 = vmatmul.f32.gmra.mxu0 %v1141
  %v1223 = vpop.f32.mrf.mxu0
  %v1224 = vadd.f32 0.0, %v1223
  %1225 = vdwg.mxu0
  %1226 = vmatpush.msra.mxu0 %v1203
  %1227 = vmatpush.msra.mxu0 %v1199
  %1228 = vmatpush.msra.mxu0 %v1195
  %1229 = vmatpush.msra.mxu0 %v1191
  %1230 = vmatpush.msra.mxu0 %v1187
  %1231 = vmatpush.msra.mxu0 %v1183
  %1232 = vmatpush.msra.mxu0 %v1179
  %1233 = vmatpush.msra.mxu0 %v1175
  %1234 = vmatpush.msra.mxu0 %v1171
  %1235 = vmatpush.msra.mxu0 %v1167
  %1236 = vmatpush.msra.mxu0 %v1163
  %1237 = vmatpush.msra.mxu0 %v1159
  %1238 = vmatpush.msra.mxu0 %v1155
  %1239 = vmatpush.msra.mxu0 %v1151
  %1240 = vmatpush.msra.mxu0 %v1147
  %1241 = vmatpush.msra.mxu0 %v1143
  %1242 = vmatmul.f32.gmra.mxu0 %v1141
  %v1243 = vpop.f32.mrf.mxu0
  %v1244 = vadd.f32 0.0, %v1243
  %1245 = vdwg.mxu0
  %1246 = vmatpush.msra.mxu0 %v1204
  %1247 = vmatpush.msra.mxu0 %v1200
  %1248 = vmatpush.msra.mxu0 %v1196
  %1249 = vmatpush.msra.mxu0 %v1192
  %1250 = vmatpush.msra.mxu0 %v1188
  %1251 = vmatpush.msra.mxu0 %v1184
  %1252 = vmatpush.msra.mxu0 %v1180
  %1253 = vmatpush.msra.mxu0 %v1176
  %1254 = vmatpush.msra.mxu0 %v1172
  %1255 = vmatpush.msra.mxu0 %v1168
  %1256 = vmatpush.msra.mxu0 %v1164
  %1257 = vmatpush.msra.mxu0 %v1160
  %1258 = vmatpush.msra.mxu0 %v1156
  %1259 = vmatpush.msra.mxu0 %v1152
  %1260 = vmatpush.msra.mxu0 %v1148
  %1261 = vmatpush.msra.mxu0 %v1144
  %1262 = vmatmul.f32.gmra.mxu0 %v1141
  %v1263 = vpop.f32.mrf.mxu0
  %v1264 = vadd.f32 0.0, %v1263
  %1265 = vdwg.mxu0
  %1266 = vmatpush.msra.mxu0 %v1205
  %1267 = vmatpush.msra.mxu0 %v1201
  %1268 = vmatpush.msra.mxu0 %v1197
  %1269 = vmatpush.msra.mxu0 %v1193
  %1270 = vmatpush.msra.mxu0 %v1189
  %1271 = vmatpush.msra.mxu0 %v1185
  %1272 = vmatpush.msra.mxu0 %v1181
  %1273 = vmatpush.msra.mxu0 %v1177
  %1274 = vmatpush.msra.mxu0 %v1173
  %1275 = vmatpush.msra.mxu0 %v1169
  %1276 = vmatpush.msra.mxu0 %v1165
  %1277 = vmatpush.msra.mxu0 %v1161
  %1278 = vmatpush.msra.mxu0 %v1157
  %1279 = vmatpush.msra.mxu0 %v1153
  %1280 = vmatpush.msra.mxu0 %v1149
  %1281 = vmatpush.msra.mxu0 %v1145
  %1282 = vmatmul.f32.gmra.mxu0 %v1141
  %v1283 = vpop.f32.mrf.mxu0
  %v1284 = vadd.f32 0.0, %v1283
  %1285 = vdwg.mxu0
  %v1286 = vadd.f32 %v1137, %v1224
  %v1287 = vadd.f32 %v1138, %v1244
  %v1288 = vadd.f32 %v1139, %v1264
  %v1289 = vadd.f32 %v1140, %v1284
  %v1290 = vxor.u32 %v1286, 2147483648
  %v1291 = vxor.u32 %v1287, 2147483648
  %v1292 = vxor.u32 %v1288, 2147483648
  %v1293 = vmul.f32 %v1290, 1.442695
  %v1294 = vpow.pop %v1293
  %v1295 = vmul.f32 %v1291, 1.442695
  %v1296 = vpow.pop %v1295
  %v1297 = vmul.f32 %v1292, 1.442695
  %v1298 = vpow.pop %v1297
  %v1299 = vadd.f32 %v1294, 1.0
  %v1300 = vadd.f32 %v1296, 1.0
  %v1301 = vadd.f32 %v1298, 1.0
  %v1302 = vrcp.pop %v1299
  %v1303 = vmul.f32 %v1299, %v1302
  %v1304 = vsub.f32 1.0, %v1303
  %v1305 = vmul.f32 %v1302, %v1304
  %v1306 = vadd.f32 %v1302, %v1305
  %vm1307 = vweird.f32 %v1299
  %vm1308 = vweird.f32 %v1302
  %vm1309 = vmor %vm1307, %vm1308
  %v1310 = vsel %vm1309, %v1302, %v1306
  %v1311 = vand.u32 2147483647, %v1299
  %vm1312 = vcmp.eq.f32.partialorder %v1311, 8.507059e+37
  %v1313 = vand.u32 %v1299, 2147483648
  %v1314 = vor.u32 1.1754944e-38, %v1313
  %v1315 = vsel %vm1312, %v1314, %v1310
  %v1316 = vmul.f32 1.0, %v1315
  %v1317 = vrcp.pop %v1300
  %v1318 = vmul.f32 %v1300, %v1317
  %v1319 = vsub.f32 1.0, %v1318
  %v1320 = vmul.f32 %v1317, %v1319
  %v1321 = vadd.f32 %v1317, %v1320
  %vm1322 = vweird.f32 %v1300
  %vm1323 = vweird.f32 %v1317
  %vm1324 = vmor %vm1322, %vm1323
  %v1325 = vsel %vm1324, %v1317, %v1321
  %v1326 = vand.u32 2147483647, %v1300
  %vm1327 = vcmp.eq.f32.partialorder %v1326, 8.507059e+37
  %v1328 = vand.u32 %v1300, 2147483648
  %v1329 = vor.u32 1.1754944e-38, %v1328
  %v1330 = vsel %vm1327, %v1329, %v1325
  %v1331 = vmul.f32 1.0, %v1330
  %v1332 = vrcp.pop %v1301
  %v1333 = vmul.f32 %v1301, %v1332
  %v1334 = vsub.f32 1.0, %v1333
  %v1335 = vmul.f32 %v1332, %v1334
  %v1336 = vadd.f32 %v1332, %v1335
  %vm1337 = vweird.f32 %v1301
  %vm1338 = vweird.f32 %v1332
  %vm1339 = vmor %vm1337, %vm1338
  %v1340 = vsel %vm1339, %v1332, %v1336
  %v1341 = vand.u32 2147483647, %v1301
  %vm1342 = vcmp.eq.f32.partialorder %v1341, 8.507059e+37
  %v1343 = vand.u32 %v1301, 2147483648
  %v1344 = vor.u32 1.1754944e-38, %v1343
  %v1345 = vsel %vm1342, %v1344, %v1340
  %v1346 = vmul.f32 1.0, %v1345
  %v1347 = vtanh.pop %v1289
  %v1348 = vld [vmem:[%s6] sm:$0xff]
  %v1349 = vmul.f32 %v1331, %v1348
  %v1350 = vmul.f32 %v1316, %v1347
  %v1351 = vadd.f32 %v1349, %v1350
  %v1352 = vtanh.pop %v1351
  %v1353 = vmul.f32 %v1346, %v1352
  %1354 = vst [vmem:[%s6] sm:$0xff] %v1351
  %1355 = vst [vmem:[%s5] sm:$0xff] %v1353
  %s1356 = scalar_lea.vmem %s4, 40
  %1357 = vst [vmem:[%s1356] sm:$0xff] %v1353
  %s1358 = scalar_lea.vmem %s0, 192
  %v1359 = vld [vmem:[%s1358] sm:$0xff]
  %v1360 = vld [vmem:[%s1358 + $0x8] sm:$0xff]
  %v1361 = vld [vmem:[%s1358 + $0x10] sm:$0xff]
  %v1362 = vld [vmem:[%s1358 + $0x18] sm:$0xff]
  %v1363 = vld [vmem:[%s5] sm:$0xff]
  %v1364 = vld [vmem:[%s1] sm:$0xff]
  %v1365 = vld [vmem:[%s1 + $0x8] sm:$0xff]
  %v1366 = vld [vmem:[%s1 + $0x10] sm:$0xff]
  %v1367 = vld [vmem:[%s1 + $0x18] sm:$0xff]
  %v1368 = vld [vmem:[%s1 + $0x20] sm:$0xff]
  %v1369 = vld [vmem:[%s1 + $0x28] sm:$0xff]
  %v1370 = vld [vmem:[%s1 + $0x30] sm:$0xff]
  %v1371 = vld [vmem:[%s1 + $0x38] sm:$0xff]
  %v1372 = vld [vmem:[%s1 + $0x40] sm:$0xff]
  %v1373 = vld [vmem:[%s1 + $0x48] sm:$0xff]
  %v1374 = vld [vmem:[%s1 + $0x50] sm:$0xff]
  %v1375 = vld [vmem:[%s1 + $0x58] sm:$0xff]
  %v1376 = vld [vmem:[%s1 + $0x60] sm:$0xff]
  %v1377 = vld [vmem:[%s1 + $0x68] sm:$0xff]
  %v1378 = vld [vmem:[%s1 + $0x70] sm:$0xff]
  %v1379 = vld [vmem:[%s1 + $0x78] sm:$0xff]
  %v1380 = vld [vmem:[%s1 + $0x80] sm:$0xff]
  %v1381 = vld [vmem:[%s1 + $0x88] sm:$0xff]
  %v1382 = vld [vmem:[%s1 + $0x90] sm:$0xff]
  %v1383 = vld [vmem:[%s1 + $0x98] sm:$0xff]
  %v1384 = vld [vmem:[%s1 + $0xa0] sm:$0xff]
  %v1385 = vld [vmem:[%s1 + $0xa8] sm:$0xff]
  %v1386 = vld [vmem:[%s1 + $0xb0] sm:$0xff]
  %v1387 = vld [vmem:[%s1 + $0xb8] sm:$0xff]
  %v1388 = vld [vmem:[%s1 + $0xc0] sm:$0xff]
  %v1389 = vld [vmem:[%s1 + $0xc8] sm:$0xff]
  %v1390 = vld [vmem:[%s1 + $0xd0] sm:$0xff]
  %v1391 = vld [vmem:[%s1 + $0xd8] sm:$0xff]
  %v1392 = vld [vmem:[%s1 + $0xe0] sm:$0xff]
  %v1393 = vld [vmem:[%s1 + $0xe8] sm:$0xff]
  %v1394 = vld [vmem:[%s1 + $0xf0] sm:$0xff]
  %v1395 = vld [vmem:[%s1 + $0xf8] sm:$0xff]
  %v1396 = vld [vmem:[%s1 + $0x100] sm:$0xff]
  %v1397 = vld [vmem:[%s1 + $0x108] sm:$0xff]
  %v1398 = vld [vmem:[%s1 + $0x110] sm:$0xff]
  %v1399 = vld [vmem:[%s1 + $0x118] sm:$0xff]
  %v1400 = vld [vmem:[%s1 + $0x120] sm:$0xff]
  %v1401 = vld [vmem:[%s1 + $0x128] sm:$0xff]
  %v1402 = vld [vmem:[%s1 + $0x130] sm:$0xff]
  %v1403 = vld [vmem:[%s1 + $0x138] sm:$0xff]
  %v1404 = vld [vmem:[%s1 + $0x140] sm:$0xff]
  %v1405 = vld [vmem:[%s1 + $0x148] sm:$0xff]
  %v1406 = vld [vmem:[%s1 + $0x150] sm:$0xff]
  %v1407 = vld [vmem:[%s1 + $0x158] sm:$0xff]
  %v1408 = vld [vmem:[%s1 + $0x160] sm:$0xff]
  %v1409 = vld [vmem:[%s1 + $0x168] sm:$0xff]
  %v1410 = vld [vmem:[%s1 + $0x170] sm:$0xff]
  %v1411 = vld [vmem:[%s1 + $0x178] sm:$0xff]
  %v1412 = vld [vmem:[%s1 + $0x180] sm:$0xff]
  %v1413 = vld [vmem:[%s1 + $0x188] sm:$0xff]
  %v1414 = vld [vmem:[%s1 + $0x190] sm:$0xff]
  %v1415 = vld [vmem:[%s1 + $0x198] sm:$0xff]
  %v1416 = vld [vmem:[%s1 + $0x1a0] sm:$0xff]
  %v1417 = vld [vmem:[%s1 + $0x1a8] sm:$0xff]
  %v1418 = vld [vmem:[%s1 + $0x1b0] sm:$0xff]
  %v1419 = vld [vmem:[%s1 + $0x1b8] sm:$0xff]
  %v1420 = vld [vmem:[%s1 + $0x1c0] sm:$0xff]
  %v1421 = vld [vmem:[%s1 + $0x1c8] sm:$0xff]
  %v1422 = vld [vmem:[%s1 + $0x1d0] sm:$0xff]
  %v1423 = vld [vmem:[%s1 + $0x1d8] sm:$0xff]
  %v1424 = vld [vmem:[%s1 + $0x1e0] sm:$0xff]
  %v1425 = vld [vmem:[%s1 + $0x1e8] sm:$0xff]
  %v1426 = vld [vmem:[%s1 + $0x1f0] sm:$0xff]
  %v1427 = vld [vmem:[%s1 + $0x1f8] sm:$0xff]
  %1428 = vmatpush.msra.mxu0 %v1424
  %1429 = vmatpush.msra.mxu0 %v1420
  %1430 = vmatpush.msra.mxu0 %v1416
  %1431 = vmatpush.msra.mxu0 %v1412
  %1432 = vmatpush.msra.mxu0 %v1408
  %1433 = vmatpush.msra.mxu0 %v1404
  %1434 = vmatpush.msra.mxu0 %v1400
  %1435 = vmatpush.msra.mxu0 %v1396
  %1436 = vmatpush.msra.mxu0 %v1392
  %1437 = vmatpush.msra.mxu0 %v1388
  %1438 = vmatpush.msra.mxu0 %v1384
  %1439 = vmatpush.msra.mxu0 %v1380
  %1440 = vmatpush.msra.mxu0 %v1376
  %1441 = vmatpush.msra.mxu0 %v1372
  %1442 = vmatpush.msra.mxu0 %v1368
  %1443 = vmatpush.msra.mxu0 %v1364
  %1444 = vmatmul.f32.gmra.mxu0 %v1363
  %v1445 = vpop.f32.mrf.mxu0
  %v1446 = vadd.f32 0.0, %v1445
  %1447 = vdwg.mxu0
  %1448 = vmatpush.msra.mxu0 %v1425
  %1449 = vmatpush.msra.mxu0 %v1421
  %1450 = vmatpush.msra.mxu0 %v1417
  %1451 = vmatpush.msra.mxu0 %v1413
  %1452 = vmatpush.msra.mxu0 %v1409
  %1453 = vmatpush.msra.mxu0 %v1405
  %1454 = vmatpush.msra.mxu0 %v1401
  %1455 = vmatpush.msra.mxu0 %v1397
  %1456 = vmatpush.msra.mxu0 %v1393
  %1457 = vmatpush.msra.mxu0 %v1389
  %1458 = vmatpush.msra.mxu0 %v1385
  %1459 = vmatpush.msra.mxu0 %v1381
  %1460 = vmatpush.msra.mxu0 %v1377
  %1461 = vmatpush.msra.mxu0 %v1373
  %1462 = vmatpush.msra.mxu0 %v1369
  %1463 = vmatpush.msra.mxu0 %v1365
  %1464 = vmatmul.f32.gmra.mxu0 %v1363
  %v1465 = vpop.f32.mrf.mxu0
  %v1466 = vadd.f32 0.0, %v1465
  %1467 = vdwg.mxu0
  %1468 = vmatpush.msra.mxu0 %v1426
  %1469 = vmatpush.msra.mxu0 %v1422
  %1470 = vmatpush.msra.mxu0 %v1418
  %1471 = vmatpush.msra.mxu0 %v1414
  %1472 = vmatpush.msra.mxu0 %v1410
  %1473 = vmatpush.msra.mxu0 %v1406
  %1474 = vmatpush.msra.mxu0 %v1402
  %1475 = vmatpush.msra.mxu0 %v1398
  %1476 = vmatpush.msra.mxu0 %v1394
  %1477 = vmatpush.msra.mxu0 %v1390
  %1478 = vmatpush.msra.mxu0 %v1386
  %1479 = vmatpush.msra.mxu0 %v1382
  %1480 = vmatpush.msra.mxu0 %v1378
  %1481 = vmatpush.msra.mxu0 %v1374
  %1482 = vmatpush.msra.mxu0 %v1370
  %1483 = vmatpush.msra.mxu0 %v1366
  %1484 = vmatmul.f32.gmra.mxu0 %v1363
  %v1485 = vpop.f32.mrf.mxu0
  %v1486 = vadd.f32 0.0, %v1485
  %1487 = vdwg.mxu0
  %1488 = vmatpush.msra.mxu0 %v1427
  %1489 = vmatpush.msra.mxu0 %v1423
  %1490 = vmatpush.msra.mxu0 %v1419
  %1491 = vmatpush.msra.mxu0 %v1415
  %1492 = vmatpush.msra.mxu0 %v1411
  %1493 = vmatpush.msra.mxu0 %v1407
  %1494 = vmatpush.msra.mxu0 %v1403
  %1495 = vmatpush.msra.mxu0 %v1399
  %1496 = vmatpush.msra.mxu0 %v1395
  %1497 = vmatpush.msra.mxu0 %v1391
  %1498 = vmatpush.msra.mxu0 %v1387
  %1499 = vmatpush.msra.mxu0 %v1383
  %1500 = vmatpush.msra.mxu0 %v1379
  %1501 = vmatpush.msra.mxu0 %v1375
  %1502 = vmatpush.msra.mxu0 %v1371
  %1503 = vmatpush.msra.mxu0 %v1367
  %1504 = vmatmul.f32.gmra.mxu0 %v1363
  %v1505 = vpop.f32.mrf.mxu0
  %v1506 = vadd.f32 0.0, %v1505
  %1507 = vdwg.mxu0
  %v1508 = vadd.f32 %v1359, %v1446
  %v1509 = vadd.f32 %v1360, %v1466
  %v1510 = vadd.f32 %v1361, %v1486
  %v1511 = vadd.f32 %v1362, %v1506
  %v1512 = vxor.u32 %v1508, 2147483648
  %v1513 = vxor.u32 %v1509, 2147483648
  %v1514 = vxor.u32 %v1510, 2147483648
  %v1515 = vmul.f32 %v1512, 1.442695
  %v1516 = vpow.pop %v1515
  %v1517 = vmul.f32 %v1513, 1.442695
  %v1518 = vpow.pop %v1517
  %v1519 = vmul.f32 %v1514, 1.442695
  %v1520 = vpow.pop %v1519
  %v1521 = vadd.f32 %v1516, 1.0
  %v1522 = vadd.f32 %v1518, 1.0
  %v1523 = vadd.f32 %v1520, 1.0
  %v1524 = vrcp.pop %v1521
  %v1525 = vmul.f32 %v1521, %v1524
  %v1526 = vsub.f32 1.0, %v1525
  %v1527 = vmul.f32 %v1524, %v1526
  %v1528 = vadd.f32 %v1524, %v1527
  %vm1529 = vweird.f32 %v1521
  %vm1530 = vweird.f32 %v1524
  %vm1531 = vmor %vm1529, %vm1530
  %v1532 = vsel %vm1531, %v1524, %v1528
  %v1533 = vand.u32 2147483647, %v1521
  %vm1534 = vcmp.eq.f32.partialorder %v1533, 8.507059e+37
  %v1535 = vand.u32 %v1521, 2147483648
  %v1536 = vor.u32 1.1754944e-38, %v1535
  %v1537 = vsel %vm1534, %v1536, %v1532
  %v1538 = vmul.f32 1.0, %v1537
  %v1539 = vrcp.pop %v1522
  %v1540 = vmul.f32 %v1522, %v1539
  %v1541 = vsub.f32 1.0, %v1540
  %v1542 = vmul.f32 %v1539, %v1541
  %v1543 = vadd.f32 %v1539, %v1542
  %vm1544 = vweird.f32 %v1522
  %vm1545 = vweird.f32 %v1539
  %vm1546 = vmor %vm1544, %vm1545
  %v1547 = vsel %vm1546, %v1539, %v1543
  %v1548 = vand.u32 2147483647, %v1522
  %vm1549 = vcmp.eq.f32.partialorder %v1548, 8.507059e+37
  %v1550 = vand.u32 %v1522, 2147483648
  %v1551 = vor.u32 1.1754944e-38, %v1550
  %v1552 = vsel %vm1549, %v1551, %v1547
  %v1553 = vmul.f32 1.0, %v1552
  %v1554 = vrcp.pop %v1523
  %v1555 = vmul.f32 %v1523, %v1554
  %v1556 = vsub.f32 1.0, %v1555
  %v1557 = vmul.f32 %v1554, %v1556
  %v1558 = vadd.f32 %v1554, %v1557
  %vm1559 = vweird.f32 %v1523
  %vm1560 = vweird.f32 %v1554
  %vm1561 = vmor %vm1559, %vm1560
  %v1562 = vsel %vm1561, %v1554, %v1558
  %v1563 = vand.u32 2147483647, %v1523
  %vm1564 = vcmp.eq.f32.partialorder %v1563, 8.507059e+37
  %v1565 = vand.u32 %v1523, 2147483648
  %v1566 = vor.u32 1.1754944e-38, %v1565
  %v1567 = vsel %vm1564, %v1566, %v1562
  %v1568 = vmul.f32 1.0, %v1567
  %v1569 = vtanh.pop %v1511
  %v1570 = vld [vmem:[%s6] sm:$0xff]
  %v1571 = vmul.f32 %v1553, %v1570
  %v1572 = vmul.f32 %v1538, %v1569
  %v1573 = vadd.f32 %v1571, %v1572
  %v1574 = vtanh.pop %v1573
  %v1575 = vmul.f32 %v1568, %v1574
  %1576 = vst [vmem:[%s6] sm:$0xff] %v1573
  %1577 = vst [vmem:[%s5] sm:$0xff] %v1575
  %s1578 = scalar_lea.vmem %s4, 48
  %1579 = vst [vmem:[%s1578] sm:$0xff] %v1575
  %s1580 = scalar_lea.vmem %s0, 224
  %v1581 = vld [vmem:[%s1580] sm:$0xff]
  %v1582 = vld [vmem:[%s1580 + $0x8] sm:$0xff]
  %v1583 = vld [vmem:[%s1580 + $0x10] sm:$0xff]
  %v1584 = vld [vmem:[%s1580 + $0x18] sm:$0xff]
  %v1585 = vld [vmem:[%s5] sm:$0xff]
  %v1586 = vld [vmem:[%s1] sm:$0xff]
  %v1587 = vld [vmem:[%s1 + $0x8] sm:$0xff]
  %v1588 = vld [vmem:[%s1 + $0x10] sm:$0xff]
  %v1589 = vld [vmem:[%s1 + $0x18] sm:$0xff]
  %v1590 = vld [vmem:[%s1 + $0x20] sm:$0xff]
  %v1591 = vld [vmem:[%s1 + $0x28] sm:$0xff]
  %v1592 = vld [vmem:[%s1 + $0x30] sm:$0xff]
  %v1593 = vld [vmem:[%s1 + $0x38] sm:$0xff]
  %v1594 = vld [vmem:[%s1 + $0x40] sm:$0xff]
  %v1595 = vld [vmem:[%s1 + $0x48] sm:$0xff]
  %v1596 = vld [vmem:[%s1 + $0x50] sm:$0xff]
  %v1597 = vld [vmem:[%s1 + $0x58] sm:$0xff]
  %v1598 = vld [vmem:[%s1 + $0x60] sm:$0xff]
  %v1599 = vld [vmem:[%s1 + $0x68] sm:$0xff]
  %v1600 = vld [vmem:[%s1 + $0x70] sm:$0xff]
  %v1601 = vld [vmem:[%s1 + $0x78] sm:$0xff]
  %v1602 = vld [vmem:[%s1 + $0x80] sm:$0xff]
  %v1603 = vld [vmem:[%s1 + $0x88] sm:$0xff]
  %v1604 = vld [vmem:[%s1 + $0x90] sm:$0xff]
  %v1605 = vld [vmem:[%s1 + $0x98] sm:$0xff]
  %v1606 = vld [vmem:[%s1 + $0xa0] sm:$0xff]
  %v1607 = vld [vmem:[%s1 + $0xa8] sm:$0xff]
  %v1608 = vld [vmem:[%s1 + $0xb0] sm:$0xff]
  %v1609 = vld [vmem:[%s1 + $0xb8] sm:$0xff]
  %v1610 = vld [vmem:[%s1 + $0xc0] sm:$0xff]
  %v1611 = vld [vmem:[%s1 + $0xc8] sm:$0xff]
  %v1612 = vld [vmem:[%s1 + $0xd0] sm:$0xff]
  %v1613 = vld [vmem:[%s1 + $0xd8] sm:$0xff]
  %v1614 = vld [vmem:[%s1 + $0xe0] sm:$0xff]
  %v1615 = vld [vmem:[%s1 + $0xe8] sm:$0xff]
  %v1616 = vld [vmem:[%s1 + $0xf0] sm:$0xff]
  %v1617 = vld [vmem:[%s1 + $0xf8] sm:$0xff]
  %v1618 = vld [vmem:[%s1 + $0x100] sm:$0xff]
  %v1619 = vld [vmem:[%s1 + $0x108] sm:$0xff]
  %v1620 = vld [vmem:[%s1 + $0x110] sm:$0xff]
  %v1621 = vld [vmem:[%s1 + $0x118] sm:$0xff]
  %v1622 = vld [vmem:[%s1 + $0x120] sm:$0xff]
  %v1623 = vld [vmem:[%s1 + $0x128] sm:$0xff]
  %v1624 = vld [vmem:[%s1 + $0x130] sm:$0xff]
  %v1625 = vld [vmem:[%s1 + $0x138] sm:$0xff]
  %v1626 = vld [vmem:[%s1 + $0x140] sm:$0xff]
  %v1627 = vld [vmem:[%s1 + $0x148] sm:$0xff]
  %v1628 = vld [vmem:[%s1 + $0x150] sm:$0xff]
  %v1629 = vld [vmem:[%s1 + $0x158] sm:$0xff]
  %v1630 = vld [vmem:[%s1 + $0x160] sm:$0xff]
  %v1631 = vld [vmem:[%s1 + $0x168] sm:$0xff]
  %v1632 = vld [vmem:[%s1 + $0x170] sm:$0xff]
  %v1633 = vld [vmem:[%s1 + $0x178] sm:$0xff]
  %v1634 = vld [vmem:[%s1 + $0x180] sm:$0xff]
  %v1635 = vld [vmem:[%s1 + $0x188] sm:$0xff]
  %v1636 = vld [vmem:[%s1 + $0x190] sm:$0xff]
  %v1637 = vld [vmem:[%s1 + $0x198] sm:$0xff]
  %v1638 = vld [vmem:[%s1 + $0x1a0] sm:$0xff]
  %v1639 = vld [vmem:[%s1 + $0x1a8] sm:$0xff]
  %v1640 = vld [vmem:[%s1 + $0x1b0] sm:$0xff]
  %v1641 = vld [vmem:[%s1 + $0x1b8] sm:$0xff]
  %v1642 = vld [vmem:[%s1 + $0x1c0] sm:$0xff]
  %v1643 = vld [vmem:[%s1 + $0x1c8] sm:$0xff]
  %v1644 = vld [vmem:[%s1 + $0x1d0] sm:$0xff]
  %v1645 = vld [vmem:[%s1 + $0x1d8] sm:$0xff]
  %v1646 = vld [vmem:[%s1 + $0x1e0] sm:$0xff]
  %v1647 = vld [vmem:[%s1 + $0x1e8] sm:$0xff]
  %v1648 = vld [vmem:[%s1 + $0x1f0] sm:$0xff]
  %v1649 = vld [vmem:[%s1 + $0x1f8] sm:$0xff]
  %1650 = vmatpush.msra.mxu0 %v1646
  %1651 = vmatpush.msra.mxu0 %v1642
  %1652 = vmatpush.msra.mxu0 %v1638
  %1653 = vmatpush.msra.mxu0 %v1634
  %1654 = vmatpush.msra.mxu0 %v1630
  %1655 = vmatpush.msra.mxu0 %v1626
  %1656 = vmatpush.msra.mxu0 %v1622
  %1657 = vmatpush.msra.mxu0 %v1618
  %1658 = vmatpush.msra.mxu0 %v1614
  %1659 = vmatpush.msra.mxu0 %v1610
  %1660 = vmatpush.msra.mxu0 %v1606
  %1661 = vmatpush.msra.mxu0 %v1602
  %1662 = vmatpush.msra.mxu0 %v1598
  %1663 = vmatpush.msra.mxu0 %v1594
  %1664 = vmatpush.msra.mxu0 %v1590
  %1665 = vmatpush.msra.mxu0 %v1586
  %1666 = vmatmul.f32.gmra.mxu0 %v1585
  %v1667 = vpop.f32.mrf.mxu0
  %v1668 = vadd.f32 0.0, %v1667
  %1669 = vdwg.mxu0
  %1670 = vmatpush.msra.mxu0 %v1647
  %1671 = vmatpush.msra.mxu0 %v1643
  %1672 = vmatpush.msra.mxu0 %v1639
  %1673 = vmatpush.msra.mxu0 %v1635
  %1674 = vmatpush.msra.mxu0 %v1631
  %1675 = vmatpush.msra.mxu0 %v1627
  %1676 = vmatpush.msra.mxu0 %v1623
  %1677 = vmatpush.msra.mxu0 %v1619
  %1678 = vmatpush.msra.mxu0 %v1615
  %1679 = vmatpush.msra.mxu0 %v1611
  %1680 = vmatpush.msra.mxu0 %v1607
  %1681 = vmatpush.msra.mxu0 %v1603
  %1682 = vmatpush.msra.mxu0 %v1599
  %1683 = vmatpush.msra.mxu0 %v1595
  %1684 = vmatpush.msra.mxu0 %v1591
  %1685 = vmatpush.msra.mxu0 %v1587
  %1686 = vmatmul.f32.gmra.mxu0 %v1585
  %v1687 = vpop.f32.mrf.mxu0
  %v1688 = vadd.f32 0.0, %v1687
  %1689 = vdwg.mxu0
  %1690 = vmatpush.msra.mxu0 %v1648
  %1691 = vmatpush.msra.mxu0 %v1644
  %1692 = vmatpush.msra.mxu0 %v1640
  %1693 = vmatpush.msra.mxu0 %v1636
  %1694 = vmatpush.msra.mxu0 %v1632
  %1695 = vmatpush.msra.mxu0 %v1628
  %1696 = vmatpush.msra.mxu0 %v1624
  %1697 = vmatpush.msra.mxu0 %v1620
  %1698 = vmatpush.msra.mxu0 %v1616
  %1699 = vmatpush.msra.mxu0 %v1612
  %1700 = vmatpush.msra.mxu0 %v1608
  %1701 = vmatpush.msra.mxu0 %v1604
  %1702 = vmatpush.msra.mxu0 %v1600
  %1703 = vmatpush.msra.mxu0 %v1596
  %1704 = vmatpush.msra.mxu0 %v1592
  %1705 = vmatpush.msra.mxu0 %v1588
  %1706 = vmatmul.f32.gmra.mxu0 %v1585
  %v1707 = vpop.f32.mrf.mxu0
  %v1708 = vadd.f32 0.0, %v1707
  %1709 = vdwg.mxu0
  %1710 = vmatpush.msra.mxu0 %v1649
  %1711 = vmatpush.msra.mxu0 %v1645
  %1712 = vmatpush.msra.mxu0 %v1641
  %1713 = vmatpush.msra.mxu0 %v1637
  %1714 = vmatpush.msra.mxu0 %v1633
  %1715 = vmatpush.msra.mxu0 %v1629
  %1716 = vmatpush.msra.mxu0 %v1625
  %1717 = vmatpush.msra.mxu0 %v1621
  %1718 = vmatpush.msra.mxu0 %v1617
  %1719 = vmatpush.msra.mxu0 %v1613
  %1720 = vmatpush.msra.mxu0 %v1609
  %1721 = vmatpush.msra.mxu0 %v1605
  %1722 = vmatpush.msra.mxu0 %v1601
  %1723 = vmatpush.msra.mxu0 %v1597
  %1724 = vmatpush.msra.mxu0 %v1593
  %1725 = vmatpush.msra.mxu0 %v1589
  %1726 = vmatmul.f32.gmra.mxu0 %v1585
  %v1727 = vpop.f32.mrf.mxu0
  %v1728 = vadd.f32 0.0, %v1727
  %1729 = vdwg.mxu0
  %v1730 = vadd.f32 %v1581, %v1668
  %v1731 = vadd.f32 %v1582, %v1688
  %v1732 = vadd.f32 %v1583, %v1708
  %v1733 = vadd.f32 %v1584, %v1728
  %v1734 = vxor.u32 %v1730, 2147483648
  %v1735 = vxor.u32 %v1731, 2147483648
  %v1736 = vxor.u32 %v1732, 2147483648
  %v1737 = vmul.f32 %v1734, 1.442695
  %v1738 = vpow.pop %v1737
  %v1739 = vmul.f32 %v1735, 1.442695
  %v1740 = vpow.pop %v1739
  %v1741 = vmul.f32 %v1736, 1.442695
  %v1742 = vpow.pop %v1741
  %v1743 = vadd.f32 %v1738, 1.0
  %v1744 = vadd.f32 %v1740, 1.0
  %v1745 = vadd.f32 %v1742, 1.0
  %v1746 = vrcp.pop %v1743
  %v1747 = vmul.f32 %v1743, %v1746
  %v1748 = vsub.f32 1.0, %v1747
  %v1749 = vmul.f32 %v1746, %v1748
  %v1750 = vadd.f32 %v1746, %v1749
  %vm1751 = vweird.f32 %v1743
  %vm1752 = vweird.f32 %v1746
  %vm1753 = vmor %vm1751, %vm1752
  %v1754 = vsel %vm1753, %v1746, %v1750
  %v1755 = vand.u32 2147483647, %v1743
  %vm1756 = vcmp.eq.f32.partialorder %v1755, 8.507059e+37
  %v1757 = vand.u32 %v1743, 2147483648
  %v1758 = vor.u32 1.1754944e-38, %v1757
  %v1759 = vsel %vm1756, %v1758, %v1754
  %v1760 = vmul.f32 1.0, %v1759
  %v1761 = vrcp.pop %v1744
  %v1762 = vmul.f32 %v1744, %v1761
  %v1763 = vsub.f32 1.0, %v1762
  %v1764 = vmul.f32 %v1761, %v1763
  %v1765 = vadd.f32 %v1761, %v1764
  %vm1766 = vweird.f32 %v1744
  %vm1767 = vweird.f32 %v1761
  %vm1768 = vmor %vm1766, %vm1767
  %v1769 = vsel %vm1768, %v1761, %v1765
  %v1770 = vand.u32 2147483647, %v1744
  %vm1771 = vcmp.eq.f32.partialorder %v1770, 8.507059e+37
  %v1772 = vand.u32 %v1744, 2147483648
  %v1773 = vor.u32 1.1754944e-38, %v1772
  %v1774 = vsel %vm1771, %v1773, %v1769
  %v1775 = vmul.f32 1.0, %v1774
  %v1776 = vrcp.pop %v1745
  %v1777 = vmul.f32 %v1745, %v1776
  %v1778 = vsub.f32 1.0, %v1777
  %v1779 = vmul.f32 %v1776, %v1778
  %v1780 = vadd.f32 %v1776, %v1779
  %vm1781 = vweird.f32 %v1745
  %vm1782 = vweird.f32 %v1776
  %vm1783 = vmor %vm1781, %vm1782
  %v1784 = vsel %vm1783, %v1776, %v1780
  %v1785 = vand.u32 2147483647, %v1745
  %vm1786 = vcmp.eq.f32.partialorder %v1785, 8.507059e+37
  %v1787 = vand.u32 %v1745, 2147483648
  %v1788 = vor.u32 1.1754944e-38, %v1787
  %v1789 = vsel %vm1786, %v1788, %v1784
  %v1790 = vmul.f32 1.0, %v1789
  %v1791 = vtanh.pop %v1733
  %v1792 = vld [vmem:[%s6] sm:$0xff]
  %v1793 = vmul.f32 %v1775, %v1792
  %v1794 = vmul.f32 %v1760, %v1791
  %v1795 = vadd.f32 %v1793, %v1794
  %v1796 = vtanh.pop %v1795
  %v1797 = vmul.f32 %v1790, %v1796
  %1798 = vst [vmem:[%s6] sm:$0xff] %v1795
  %1799 = vst [vmem:[%s5] sm:$0xff] %v1797
  %s1800 = scalar_lea.vmem %s4, 56
  %1801 = vst [vmem:[%s1800] sm:$0xff] %v1797
  // Predicated region
  $region22: #{custom_lstm_forward.1} parent=0 // pred_check
    _
  $region23: #{custom_lstm_forward.1} parent=0 // pred_check_branch
    %1803 = sbr.rel (0) target = $region25
  $region24: #{custom_lstm_forward.1} parent=0 // pred_region
    _
  $region25: #{custom_lstm_forward.1} parent=0 // pred_fallthru
    _
  // Predicated region
  $region26: #{custom_lstm_forward.1} parent=0 // pred_check
    _
  $region27: #{custom_lstm_forward.1} parent=0 // pred_check_branch
    %1805 = sbr.rel (0) target = $region29
  $region28: #{custom_lstm_forward.1} parent=0 // pred_region
    _
  $region29: #{custom_lstm_forward.1} parent=0 // pred_fallthru
    _
  // Predicated region
  $region30: #{custom_lstm_forward.1} parent=0 // pred_check
    _
  $region31: #{custom_lstm_forward.1} parent=0 // pred_check_branch
    %1807 = sbr.rel (0) target = $region33
  $region32: #{custom_lstm_forward.1} parent=0 // pred_region
    _
  $region33: #{custom_lstm_forward.1} parent=0 // pred_fallthru
    _
  // Predicated region
  $region34: #{custom_lstm_forward.1} parent=0 // pred_check
    _
  $region35: #{custom_lstm_forward.1} parent=0 // pred_check_branch
    %1809 = sbr.rel (0) target = $region37
  $region36: #{custom_lstm_forward.1} parent=0 // pred_region
    _
  $region37: #{custom_lstm_forward.1} parent=0 // pred_fallthru
    _
  // Predicated region
  $region38: #{custom_lstm_forward.1} parent=0 // pred_check
    _
  $region39: #{custom_lstm_forward.1} parent=0 // pred_check_branch
    %1811 = sbr.rel (0) target = $region41
  $region40: #{custom_lstm_forward.1} parent=0 // pred_region
    _
  $region41: #{custom_lstm_forward.1} parent=0 // pred_fallthru
    _
  // Predicated region
  $region42: #{custom_lstm_forward.1} parent=0 // pred_check
    _
  $region43: #{custom_lstm_forward.1} parent=0 // pred_check_branch
    %1813 = sbr.rel (0) target = $region45
  $region44: #{custom_lstm_forward.1} parent=0 // pred_region
    _
  $region45: #{custom_lstm_forward.1} parent=0 // pred_fallthru
    _

</llo_original>
